<compile_context>
chip_gen: v7x
topology: tpu7x:2x2x1
jax: 0.10.0
libtpu: 0.0.40
codegen_flags: <defaults>
</compile_context>

<pallas_src>
import functools

import jax
import jax.numpy as jnp
from jax.experimental import pallas as pl
from jax.experimental.pallas import tpu as pltpu


def _round_up(x, m):
    return (x + m - 1) // m * m


def _vmem_budget_bytes():
    """Single generation-aware VMEM number used for tile choice AND vmem_limit_bytes."""
    cap = 64 * 1024 * 1024  # conservative fallback = v7x per-core VMEM
    try:
        info = pltpu.get_tpu_info()
        cap = int(getattr(info, "vmem_capacity_bytes", cap))
    except Exception:
        pass
    # Leave 25% headroom for compiler-internal scratch and pipeline buffers
    # (~96 MiB on v5e/v6e's 128 MiB, ~48 MiB on v7x's 64 MiB).
    return (cap * 3) // 4


def _choose_row_tile(n_pad, min_tm, step_bytes_fn, budget):
    """Largest row tile whose per-step working set fits the budget.

    n_pad is a multiple of 128; candidates are 128-aligned (plus the full padded N for
    small graphs so they run one grid step per batch), with dtype-aware fallbacks.
    """
    cands = []
    if n_pad <= 1024:
        cands.append(n_pad)                 # whole (padded) graph per batch
    cands += [512, 256, 128, 64, 32, 16, 8]
    for tm in cands:
        if tm < min_tm or tm > n_pad or n_pad % tm:
            continue
        if step_bytes_fn(tm) <= budget:
            return tm
    return min_tm  # may exceed budget; still correct


# ---------------------------------------------------------------------------
# Kernels
# ---------------------------------------------------------------------------

def _graphconv_axw_kernel(adj_ref, xw_ref, *rest, add_self: bool,
                          normalize_embedding: bool, use_bias: bool, tm: int):
    """Reorder path: xw = x @ W precomputed once per batch on the wrapper side.

    Refs per grid step (b, r):
      adj_ref: (1, TM, Np)   rows [r*TM, (r+1)*TM) of batch b's adjacency
      xw_ref:  (1, Np, Dp)   resident per batch
      b_ref:   (1, Dp)       only when use_bias (f32)
      o_ref:   (1, TM, Dp)
    """
    if use_bias:
        b_ref, o_ref = rest
    else:
        (o_ref,) = rest

    y = jnp.dot(adj_ref[0], xw_ref[0], preferred_element_type=jnp.float32)  # (TM, Dp) f32

    if add_self:
        # (adj@x + x) @ W == adj@(x@W) + x@W  -> just add the matching xw row slice.
        row0 = pl.multiple_of(pl.program_id(1) * tm, tm)
        y = y + xw_ref[0, pl.ds(row0, tm), :].astype(jnp.float32)

    if use_bias:
        y = y + b_ref[...]

    if normalize_embedding:
        # F.normalize(y, p=2, dim=2) == y * rsqrt(max(sum(y^2), 1e-24))  (EUP rsqrt)
        sq = jnp.sum(y * y, axis=-1, keepdims=True)
        y = y * jax.lax.rsqrt(jnp.maximum(sq, 1e-24))

    o_ref[0] = y.astype(o_ref.dtype)


def _graphconv_fused_kernel(adj_ref, x_ref, w_ref, *rest, add_self: bool,
                            normalize_embedding: bool, use_bias: bool, tm: int):
    """Fused path (Dout_pad >= Din_pad): (adj @ x [+ x]) @ W inside the kernel.

    Refs per grid step (b, r):
      adj_ref: (1, TM, Np)
      x_ref:   (1, Np, Din_p)   resident per batch
      w_ref:   (Din_p, Dp)      resident
      b_ref:   (1, Dp)          only when use_bias (f32)
      o_ref:   (1, TM, Dp)
    """
    if use_bias:
        b_ref, o_ref = rest
    else:
        (o_ref,) = rest

    y = jnp.dot(adj_ref[0], x_ref[0], preferred_element_type=jnp.float32)   # (TM, Din_p) f32

    if add_self:
        row0 = pl.multiple_of(pl.program_id(1) * tm, tm)
        y = y + x_ref[0, pl.ds(row0, tm), :].astype(jnp.float32)

    y = jnp.dot(y.astype(w_ref.dtype), w_ref[...],
                preferred_element_type=jnp.float32)                          # (TM, Dp) f32

    if use_bias:
        y = y + b_ref[...]

    if normalize_embedding:
        sq = jnp.sum(y * y, axis=-1, keepdims=True)
        y = y * jax.lax.rsqrt(jnp.maximum(sq, 1e-24))

    o_ref[0] = y.astype(o_ref.dtype)


# ---------------------------------------------------------------------------
# Wrapper
# ---------------------------------------------------------------------------

def graph_conv(x, adj, weight, bias=None, *, add_self=False, normalize_embedding=False,
               matmul_dtype=None, out_dtype=None, row_tile=None):
    """Pallas GraphConv forward.

    x:      (B, N, Din) float32
    adj:    (B, N, N)   float32
    weight: (Din, Dout) float32
    bias:   (Dout,) float32 or None
    matmul_dtype: optional dtype (e.g. jnp.bfloat16) for the MXU operands; accumulation
                  and the epilogue (add_self / bias / normalize) stay in float32.
    out_dtype:    optional output dtype (e.g. jnp.bfloat16 to halve HBM writeback).
    returns (B, N, Dout) in out_dtype (default: x.dtype)
    """
    B, N, Din = x.shape
    assert adj.shape == (B, N, N)
    assert weight.shape[0] == Din
    Dout = weight.shape[1]
    use_bias = bias is not None

    mm_dtype = jnp.dtype(matmul_dtype) if matmul_dtype is not None else jnp.dtype(x.dtype)
    out_dt = jnp.dtype(out_dtype) if out_dtype is not None else jnp.dtype(x.dtype)
    mm_isize = mm_dtype.itemsize
    out_isize = out_dt.itemsize

    # Lane-dense padding: N, Din, Dout all rounded up to multiples of 128.
    n_pad = _round_up(N, 128)
    din_pad = _round_up(Din, 128)
    dout_pad = _round_up(Dout, 128)

    # Pick the cheaper ordering on the *padded* dims:
    #   reorder: adj @ (x @ W)  with xw hoisted to the wrapper (one XLA dot per call)
    #   fused:   (adj @ x [+x]) @ W  inside the kernel
    reorder = dout_pad < din_pad

    # dtype-aware minimum sublane tile for the adj row slab.
    min_tm = 8 if mm_isize >= 4 else (16 if mm_isize == 2 else 32)

    budget = _vmem_budget_bytes()

    if reorder:
        def step_bytes(tm):
            return (2 * tm * n_pad * mm_isize           # adj slab (double-buffered)
                    + 1 * n_pad * dout_pad * mm_isize   # xw resident (single-buffered)
                    + 2 * tm * dout_pad * out_isize     # output tile (double-buffered)
                    + tm * dout_pad * 4                 # f32 accumulator / epilogue
                    + dout_pad * 4)                     # bias
    else:
        def step_bytes(tm):
            return (2 * tm * n_pad * mm_isize
                    + 1 * n_pad * din_pad * mm_isize    # x resident
                    + 1 * din_pad * dout_pad * mm_isize # W resident
                    + 2 * tm * dout_pad * out_isize
                    + tm * (din_pad + dout_pad) * 4     # f32 intermediates
                    + dout_pad * 4)

    tm = row_tile if row_tile is not None else _choose_row_tile(n_pad, min_tm, step_bytes, budget)
    assert n_pad % tm == 0 and tm % min_tm == 0, (
        f"row_tile={tm} incompatible with N={N} (padded {n_pad}) and dtype {mm_dtype}")
    n_tiles = n_pad // tm

    # ---- wrapper-side padding / casting -----------------------------------
    adj_p = adj
    if n_pad != N:
        adj_p = jnp.pad(adj_p, ((0, 0), (0, n_pad - N), (0, n_pad - N)))
    adj_p = adj_p.astype(mm_dtype)

    mat_args = [adj_p]
    spec_defs = [((1, tm, n_pad), lambda b, r: (b, r, 0), False)]   # adj: pipelined over r

    if reorder:
        w_p = weight
        if dout_pad != Dout:
            w_p = jnp.pad(w_p, ((0, 0), (0, dout_pad - Dout)))
        # Hoisted once-per-batch product (f32 accumulation), padded rows, cast for the MXU.
        xw = jnp.matmul(x, w_p, preferred_element_type=jnp.float32)        # (B, N, Dp)
        if n_pad != N:
            xw = jnp.pad(xw, ((0, 0), (0, n_pad - N), (0, 0)))
        mat_args.append(xw.astype(mm_dtype))
        spec_defs.append(((1, n_pad, dout_pad), lambda b, r: (b, 0, 0), True))   # resident
    else:
        x_p = x
        if n_pad != N or din_pad != Din:
            x_p = jnp.pad(x_p, ((0, 0), (0, n_pad - N), (0, din_pad - Din)))
        w_p = weight
        if din_pad != Din or dout_pad != Dout:
            w_p = jnp.pad(w_p, ((0, din_pad - Din), (0, dout_pad - Dout)))
        mat_args.append(x_p.astype(mm_dtype))
        mat_args.append(w_p.astype(mm_dtype))
        spec_defs.append(((1, n_pad, din_pad), lambda b, r: (b, 0, 0), True))    # resident
        spec_defs.append(((din_pad, dout_pad), lambda b, r: (0, 0), True))       # resident

    if use_bias:
        b_p = bias
        if dout_pad != Dout:
            b_p = jnp.pad(b_p, (0, dout_pad - Dout))
        mat_args.append(b_p.reshape(1, dout_pad).astype(jnp.float32))   # epilogue stays f32
        spec_defs.append(((1, dout_pad), lambda b, r: (0, 0), True))

    # ---- scheduling hints --------------------------------------------------
    vmem_limit = int(budget)
    if reorder:
        flops = 2 * B * n_pad * n_pad * dout_pad
    else:
        flops = 2 * B * (n_pad * n_pad * din_pad + n_pad * din_pad * dout_pad)
    transcendentals = B * n_pad if normalize_embedding else 0
    bytes_accessed = (sum(int(a.size) * a.dtype.itemsize for a in mat_args)
                      + B * n_pad * dout_pad * out_isize)

    kernel_fn = _graphconv_axw_kernel if reorder else _graphconv_fused_kernel
    kernel = functools.partial(
        kernel_fn,
        add_self=add_self,
        normalize_embedding=normalize_embedding,
        use_bias=use_bias,
        tm=tm,
    )

    def build_and_call(single_buffer_resident):
        in_specs = []
        for shape, idx_map, resident in spec_defs:
            if resident and single_buffer_resident:
                # Batch-resident operands: only re-DMA'd when b changes -> single buffer.
                in_specs.append(pl.BlockSpec(shape, idx_map, pipeline_mode=pl.Buffered(1)))
            else:
                in_specs.append(pl.BlockSpec(shape, idx_map))
        out_spec = pl.BlockSpec((1, tm, dout_pad), lambda b, r: (b, r, 0))
        return pl.pallas_call(
            kernel,
            out_shape=jax.ShapeDtypeStruct((B, n_pad, dout_pad), out_dt),
            grid_spec=pltpu.PrefetchScalarGridSpec(
                num_scalar_prefetch=0,
                grid=(B, n_tiles),
                in_specs=in_specs,
                out_specs=out_spec,
            ),
            compiler_params=pltpu.CompilerParams(
                dimension_semantics=("parallel", "parallel"),
                vmem_limit_bytes=vmem_limit,
            ),
            cost_estimate=pl.CostEstimate(
                flops=int(flops),
                transcendentals=int(transcendentals),
                bytes_accessed=int(bytes_accessed),
            ),
        )(*mat_args)

    try:
        out = build_and_call(True)
    except Exception:
        # pipeline_mode / pl.Buffered not supported on this jax build -> default buffering.
        out = build_and_call(False)

    if n_pad != N or dout_pad != Dout:
        out = out[:, :N, :Dout]
    return out


def graph_conv_ref(x, adj, weight, bias=None, *, add_self=False,
                   normalize_embedding=False):
    """Pure-JAX reference matching the PyTorch forward."""
    y = jnp.matmul(adj, x)
    if add_self:
        y = y + x
    y = jnp.matmul(y, weight)
    if bias is not None:
        y = y + bias
    if normalize_embedding:
        norm = jnp.maximum(jnp.linalg.norm(y, axis=2, keepdims=True), 1e-12)
        y = y / norm
    return y


if __name__ == "__main__":
    key = jax.random.PRNGKey(0)

    def make_inputs(k, B, N, Din, Dout, with_bias=True):
        kx, ka, kw, kb = jax.random.split(k, 4)
        x = jax.random.normal(kx, (B, N, Din), dtype=jnp.float32)
        adj = jax.random.uniform(ka, (B, N, N), dtype=jnp.float32)
        w = jax.random.normal(kw, (Din, Dout), dtype=jnp.float32) * 0.1
        b = (jax.random.normal(kb, (Dout,), dtype=jnp.float32) * 0.1) if with_bias else None
        return x, adj, w, b

    # (B, N, Din, Dout, add_self, normalize, with_bias, row_tile)
    configs = [
        (2, 8, 16, 32, False, False, True, None),    # module defaults, tiny graph (fused path)
        (2, 20, 16, 40, True, True, True, None),     # ragged N / Dout -> padding + full epilogue
        (1, 16, 160, 32, True, True, False, None),   # Din_pad > Dout_pad -> hoisted xw path, no bias
        (2, 200, 160, 32, True, True, True, 128),    # multi row-tile, xw path, add_self slice at r>0
        (1, 200, 32, 64, True, False, True, 128),    # multi row-tile, fused path
    ]
    keys = jax.random.split(key, len(configs) + 1)
    for cfg, k in zip(configs, keys[:-1]):
        B, N, Din, Dout, add_self, norm, with_bias, rt = cfg
        x, adj, w, b = make_inputs(k, B, N, Din, Dout, with_bias)
        out = jax.block_until_ready(
            graph_conv(x, adj, w, b, add_self=add_self, normalize_embedding=norm, row_tile=rt))
        ref = graph_conv_ref(x, adj, w, b, add_self=add_self, normalize_embedding=norm)
        assert out.shape == ref.shape, f"shape mismatch for cfg {cfg}"
        assert jnp.allclose(out, ref, atol=2e-3, rtol=2e-3), f"mismatch for cfg {cfg}"

    # bf16 MXU operands + bf16 output (f32 accumulation & epilogue), loose tolerance.
    x, adj, w, b = make_inputs(keys[-1], 2, 24, 32, 64, True)
    out = jax.block_until_ready(
        graph_conv(x, adj, w, b, normalize_embedding=True,
                   matmul_dtype=jnp.bfloat16, out_dtype=jnp.bfloat16))
    ref = graph_conv_ref(x, adj, w, b, normalize_embedding=True)
    assert out.shape == ref.shape and out.dtype == jnp.bfloat16
    assert jnp.allclose(out.astype(jnp.float32), ref, atol=5e-2, rtol=5e-2), "bf16 mismatch"

    print("KERNEL_OK")
</pallas_src>

<mosaic_0001>
module attributes {stable_mosaic.version = 11 : i64} {
  func.func @_graphconv_fused_kernel(%arg0: i32, %arg1: i32, %arg2: memref<1x128x128xf32, #tpu.memory_space<vmem>>, %arg3: memref<1x128x128xf32, #tpu.memory_space<vmem>>, %arg4: memref<128x128xf32, #tpu.memory_space<vmem>>, %arg5: memref<1x128xf32, #tpu.memory_space<vmem>>, %arg6: memref<1x128x128xf32, #tpu.memory_space<vmem>>) attributes {dimension_semantics = [#tpu.dimension_semantics<parallel>, #tpu.dimension_semantics<parallel>], iteration_bounds = array<i64: 2, 1>, scalar_prefetch = 0 : i64, scratch_operands = 0 : i64, tpu.core_type = #tpu.core_type<tc>, window_params = [{transform_indices = @transform_0, window_bounds = array<i64: 1, 128, 128>}, {pipeline_mode = #tpu.pipeline_mode<synchronous>, transform_indices = @transform_1, window_bounds = array<i64: 1, 128, 128>}, {pipeline_mode = #tpu.pipeline_mode<synchronous>, transform_indices = @transform_2, window_bounds = array<i64: 128, 128>}, {pipeline_mode = #tpu.pipeline_mode<synchronous>, transform_indices = @transform_3, window_bounds = array<i64: 1, 128>}, {transform_indices = @transform_4, window_bounds = array<i64: 1, 128, 128>}]} {
    %c0 = arith.constant 0 : index
    %c0_0 = arith.constant 0 : index
    %c0_1 = arith.constant 0 : index
    %0 = vector.load %arg2[%c0, %c0_0, %c0_1] : memref<1x128x128xf32, #tpu.memory_space<vmem>>, vector<1x128x128xf32>
    %1 = vector.shape_cast %0 : vector<1x128x128xf32> to vector<128x128xf32>
    %c0_2 = arith.constant 0 : index
    %c0_3 = arith.constant 0 : index
    %c0_4 = arith.constant 0 : index
    %2 = vector.load %arg3[%c0_2, %c0_3, %c0_4] : memref<1x128x128xf32, #tpu.memory_space<vmem>>, vector<1x128x128xf32>
    %3 = vector.shape_cast %2 : vector<1x128x128xf32> to vector<128x128xf32>
    %cst = arith.constant dense<0.000000e+00> : vector<128x128xf32>
    %4 = tpu.matmul %1, %3, %cst {dimension_numbers = #tpu.dot_dimension_numbers<[1], [0], [0], [1], [0, 0, 1, 1], [], []>} : vector<128x128xf32>, vector<128x128xf32>, vector<128x128xf32> -> vector<128x128xf32>
    %c0_5 = arith.constant 0 : index
    %c0_6 = arith.constant 0 : index
    %5 = vector.load %arg4[%c0_5, %c0_6] : memref<128x128xf32, #tpu.memory_space<vmem>>, vector<128x128xf32>
    %cst_7 = arith.constant dense<0.000000e+00> : vector<128x128xf32>
    %6 = tpu.matmul %4, %5, %cst_7 {dimension_numbers = #tpu.dot_dimension_numbers<[1], [0], [0], [1], [0, 0, 1, 1], [], []>} : vector<128x128xf32>, vector<128x128xf32>, vector<128x128xf32> -> vector<128x128xf32>
    %c0_8 = arith.constant 0 : index
    %c0_9 = arith.constant 0 : index
    %7 = vector.load %arg5[%c0_8, %c0_9] : memref<1x128xf32, #tpu.memory_space<vmem>>, vector<1x128xf32>
    %8 = vector.broadcast %7 : vector<1x128xf32> to vector<128x128xf32>
    %9 = arith.addf %6, %8 : vector<128x128xf32>
    %c0_10 = arith.constant 0 : index
    %c0_11 = arith.constant 0 : index
    %c0_12 = arith.constant 0 : index
    %10 = vector.load %arg6[%c0_10, %c0_11, %c0_12] : memref<1x128x128xf32, #tpu.memory_space<vmem>>, vector<1x128x128xf32>
    %11 = vector.shape_cast %10 : vector<1x128x128xf32> to vector<128x128xf32>
    %12 = vector.shape_cast %9 : vector<128x128xf32> to vector<1x128x128xf32>
    tpu.vector_store %arg6[%c0_10, %c0_11, %c0_12], %12 {strides = array<i32>} : memref<1x128x128xf32, #tpu.memory_space<vmem>>, vector<1x128x128xf32>,
    return
  }
  func.func @transform_0(%arg0: i32, %arg1: i32) -> (i32, i32, i32) {
    %c0_i32 = arith.constant 0 : i32
    %c0_i32_0 = arith.constant 0 : i32
    return %arg0, %arg1, %c0_i32 : i32, i32, i32
  }
  func.func @transform_1(%arg0: i32, %arg1: i32) -> (i32, i32, i32) {
    %c0_i32 = arith.constant 0 : i32
    %c0_i32_0 = arith.constant 0 : i32
    %c0_i32_1 = arith.constant 0 : i32
    return %arg0, %c0_i32, %c0_i32_0 : i32, i32, i32
  }
  func.func @transform_2(%arg0: i32, %arg1: i32) -> (i32, i32) {
    %c0_i32 = arith.constant 0 : i32
    %c0_i32_0 = arith.constant 0 : i32
    %c0_i32_1 = arith.constant 0 : i32
    return %c0_i32, %c0_i32_0 : i32, i32
  }
  func.func @transform_3(%arg0: i32, %arg1: i32) -> (i32, i32) {
    %c0_i32 = arith.constant 0 : i32
    %c0_i32_0 = arith.constant 0 : i32
    %c0_i32_1 = arith.constant 0 : i32
    return %c0_i32, %c0_i32_0 : i32, i32
  }
  func.func @transform_4(%arg0: i32, %arg1: i32) -> (i32, i32, i32) {
    %c0_i32 = arith.constant 0 : i32
    %c0_i32_0 = arith.constant 0 : i32
    return %arg0, %arg1, %c0_i32 : i32, i32, i32
  }
}

module attributes {stable_mosaic.version = 11 : i64} {
  func.func @_graphconv_fused_kernel(%arg0: i32, %arg1: i32, %arg2: memref<1x128x128xf32, #tpu.memory_space<vmem>>, %arg3: memref<1x128x128xf32, #tpu.memory_space<vmem>>, %arg4: memref<128x128xf32, #tpu.memory_space<vmem>>, %arg5: memref<1x128xf32, #tpu.memory_space<vmem>>, %arg6: memref<1x128x128xf32, #tpu.memory_space<vmem>>) attributes {dimension_semantics = [#tpu.dimension_semantics<parallel>, #tpu.dimension_semantics<parallel>], iteration_bounds = array<i64: 2, 1>, scalar_prefetch = 0 : i64, scratch_operands = 0 : i64, tpu.core_type = #tpu.core_type<tc>, window_params = [{transform_indices = @transform_0, window_bounds = array<i64: 1, 128, 128>}, {transform_indices = @transform_1, window_bounds = array<i64: 1, 128, 128>}, {pipeline_mode = #tpu.pipeline_mode<synchronous>, transform_indices = @transform_2, window_bounds = array<i64: 128, 128>}, {pipeline_mode = #tpu.pipeline_mode<synchronous>, transform_indices = @transform_3, window_bounds = array<i64: 1, 128>}, {transform_indices = @transform_4, window_bounds = array<i64: 1, 128, 128>}]} {
    %c0 = arith.constant 0 : index
    %c0_0 = arith.constant 0 : index
    %c0_1 = arith.constant 0 : index
    %0 = vector.load %arg2[%c0, %c0_0, %c0_1] : memref<1x128x128xf32, #tpu.memory_space<vmem>>, vector<1x128x128xf32>
    %1 = vector.shape_cast %0 : vector<1x128x128xf32> to vector<128x128xf32>
    %c0_2 = arith.constant 0 : index
    %c0_3 = arith.constant 0 : index
    %c0_4 = arith.constant 0 : index
    %2 = vector.load %arg3[%c0_2, %c0_3, %c0_4] : memref<1x128x128xf32, #tpu.memory_space<vmem>>, vector<1x128x128xf32>
    %3 = vector.shape_cast %2 : vector<1x128x128xf32> to vector<128x128xf32>
    %cst = arith.constant dense<0.000000e+00> : vector<128x128xf32>
    %4 = tpu.matmul %1, %3, %cst {dimension_numbers = #tpu.dot_dimension_numbers<[1], [0], [0], [1], [0, 0, 1, 1], [], []>} : vector<128x128xf32>, vector<128x128xf32>, vector<128x128xf32> -> vector<128x128xf32>
    %c0_5 = arith.constant 0 : index
    %c0_6 = arith.constant 0 : index
    %5 = vector.load %arg4[%c0_5, %c0_6] : memref<128x128xf32, #tpu.memory_space<vmem>>, vector<128x128xf32>
    %cst_7 = arith.constant dense<0.000000e+00> : vector<128x128xf32>
    %6 = tpu.matmul %4, %5, %cst_7 {dimension_numbers = #tpu.dot_dimension_numbers<[1], [0], [0], [1], [0, 0, 1, 1], [], []>} : vector<128x128xf32>, vector<128x128xf32>, vector<128x128xf32> -> vector<128x128xf32>
    %c0_8 = arith.constant 0 : index
    %c0_9 = arith.constant 0 : index
    %7 = vector.load %arg5[%c0_8, %c0_9] : memref<1x128xf32, #tpu.memory_space<vmem>>, vector<1x128xf32>
    %8 = vector.broadcast %7 : vector<1x128xf32> to vector<128x128xf32>
    %9 = arith.addf %6, %8 : vector<128x128xf32>
    %c0_10 = arith.constant 0 : index
    %c0_11 = arith.constant 0 : index
    %c0_12 = arith.constant 0 : index
    %10 = vector.load %arg6[%c0_10, %c0_11, %c0_12] : memref<1x128x128xf32, #tpu.memory_space<vmem>>, vector<1x128x128xf32>
    %11 = vector.shape_cast %10 : vector<1x128x128xf32> to vector<128x128xf32>
    %12 = vector.shape_cast %9 : vector<128x128xf32> to vector<1x128x128xf32>
    tpu.vector_store %arg6[%c0_10, %c0_11, %c0_12], %12 {strides = array<i32>} : memref<1x128x128xf32, #tpu.memory_space<vmem>>, vector<1x128x128xf32>,
    return
  }
  func.func @transform_0(%arg0: i32, %arg1: i32) -> (i32, i32, i32) {
    %c0_i32 = arith.constant 0 : i32
    %c0_i32_0 = arith.constant 0 : i32
    return %arg0, %arg1, %c0_i32 : i32, i32, i32
  }
  func.func @transform_1(%arg0: i32, %arg1: i32) -> (i32, i32, i32) {
    %c0_i32 = arith.constant 0 : i32
    %c0_i32_0 = arith.constant 0 : i32
    %c0_i32_1 = arith.constant 0 : i32
    return %arg0, %c0_i32, %c0_i32_0 : i32, i32, i32
  }
  func.func @transform_2(%arg0: i32, %arg1: i32) -> (i32, i32) {
    %c0_i32 = arith.constant 0 : i32
    %c0_i32_0 = arith.constant 0 : i32
    %c0_i32_1 = arith.constant 0 : i32
    return %c0_i32, %c0_i32_0 : i32, i32
  }
  func.func @transform_3(%arg0: i32, %arg1: i32) -> (i32, i32) {
    %c0_i32 = arith.constant 0 : i32
    %c0_i32_0 = arith.constant 0 : i32
    %c0_i32_1 = arith.constant 0 : i32
    return %c0_i32, %c0_i32_0 : i32, i32
  }
  func.func @transform_4(%arg0: i32, %arg1: i32) -> (i32, i32, i32) {
    %c0_i32 = arith.constant 0 : i32
    %c0_i32_0 = arith.constant 0 : i32
    return %arg0, %arg1, %c0_i32 : i32, i32, i32
  }
}

</mosaic_0001>

<llo_original>
// kernel: tpu_custom_call.1
$region0: #{tpu_custom_call.1}
  #allocation0 [shape = 'u32[]', space=smem, size = 0x4, offset = 0x4, fixed_abs, tag = 'smem constant byte address 0x4 - core index']
  #allocation1 [shape = 'u32[144,128]{1,0:T(1,128)}', space=vmem, size = 0x12000, scoped, tag = 'internal scratch']
  %s0 = inlined_call_operand.hbm [shape: f32[2,128,128], index: 0, kind: input, shape index: {}]
  %s1 = inlined_call_operand.hbm [shape: f32[2,128,128], index: 1, kind: input, shape index: {}]
  %s2 = inlined_call_operand.hbm [shape: f32[128,128], index: 2, kind: input, shape index: {}]
  %s3 = inlined_call_operand.vmem [shape: f32[1,128], index: 3, kind: input, shape index: {}]
  %s4 = inlined_call_operand.hbm [shape: f32[2,128,128], index: 4, kind: output, shape index: {}]
  %s5 = sld [smem:[#allocation0]]
  $region61: #{tpu_custom_call.1} parent=0
    _
  %s7 = ssub.s32 1, %s5
  %s8 = scalar_select 0, %s7, %s5
  $region1: #{tpu_custom_call.1} parent=0
    #allocation2 [shape = 'u8[131072]{0}', space=vmem, size = 0x20000, scoped, tag = 'input window, operand 0']
    #allocation3 [shape = 's32[2]{0}', space=sflag, size = 0x8, scoped, tag = 'scoped memory for tpu_custom_call.1']
    #allocation4 [shape = 's32[2]{0}', space=sflag, size = 0x8, scoped, tag = 'scoped memory for tpu_custom_call.1']
    #allocation5 [shape = 'u8[65536]{0}', space=vmem, size = 0x10000, scoped, tag = 'input window, operand 1, single buffered']
    #allocation6 [shape = 's32[1]{0}', space=sflag, size = 0x4, scoped, tag = 'scoped memory for tpu_custom_call.1']
    #allocation7 [shape = 'u8[65536]{0}', space=vmem, size = 0x10000, scoped, tag = 'input window, operand 2, single buffered']
    #allocation8 [shape = 'u8[131072]{0}', space=vmem, size = 0x20000, scoped, tag = 'output window, operand 0']
    %9 = vsyncpa [#allocation3], 0
    %s10 = scalar_lea.sflag [#allocation3], 1
    %11 = vsyncpa %s10, 0
    %12 = vsyncpa [#allocation6], 0
    %13 = vsyncpa [#allocation4], 0
    %s14 = scalar_lea.sflag [#allocation4], 1
    %15 = vsyncpa %s14, 0
    loop: start=0, step=1, limit=4
    $region2: #{tpu_custom_call.1} parent=1 // loop_pre_header
      _
    $region3: #{tpu_custom_call.1} parent=1 // loop_header
      %s17 = sphi 0, %s21
      %p18 = scmp.ge.s32.totalorder %s17, 4
      %s24 = sphi 0, %s36
      %s25 = sphi 0, %s32
      %s26 = sphi 0, %s24
      %s27 = sphi 0, %s25
      %s28 = sphi 0, %s26
      %s29 = sphi 0, %s27
      %s41 = sphi 0, %s43
      %s44 = sphi 0, %s41
      %s45 = sphi 0, %s44
      %s61 = sphi 0, %s45
      %s67 = sphi 0, %s69
      %s70 = sphi 0, %s67
      %s71 = sphi 0, %s70
      %s87 = sphi 0, %s71
      %s91 = sphi 0, %s91
      %s93 = sphi 0, %s91
      %s94 = sphi 0, %s93
      %s108 = sphi 0, %s94
      %s112 = sphi 0, %s112
      %s114 = sphi 0, %s112
      %s115 = sphi 0, %s114
      %s129 = sphi 0, %s115
      %s137 = sphi 0, %s139
      %s140 = sphi 0, %s137
      %s141 = sphi 0, %s140
      %s157 = sphi 0, %s141
    $region4: #{tpu_custom_call.1} parent=1 // loop_header_branch
      %20 = sbr.rel (%p18) target = $region8
    $region5: #{tpu_custom_call.1} parent=1 // loop_body
      %s22 = ssub.s32 %s17, 1
      %s23 = ssub.s32 %s17, 2
      %s30 = sadd.s32 1, %s25
      %p31 = scmp.ge.s32.totalorder %s30, 1
      %s32 = scalar_select %p31, 0, %s30
      %s33 = sadd.s32 1, %s24
      %s34 = scalar_select %p31, %s33, %s24
      %p35 = scmp.ge.s32.totalorder %s34, 2
      %s36 = scalar_select %p35, 0, %s34
      %s37 = ssub.s32 %s24, %s36
      %s38 = ssub.s32 %s25, %s32
      %s39 = sor.u32 %s37, %s38
      %p40 = scmp.eq.s32.totalorder %s39, 0
      %s42 = sadd.s32 %s41, 1
      %s43 = scalar_select %p40, %s41, %s42
      %p46 = pneg %p40
      %p47 = scmp.eq.s32.totalorder %s17, 1
      %p48 = por %p46, %p47
      %p49 = scmp.ne.s32.totalorder %s41, %s44
      %p50 = scmp.eq.s32.totalorder %s17, 0
      %p51 = por %p49, %p50
      %p52 = scmp.ne.s32.totalorder %s41, %s44
      %p53 = scmp.eq.s32.totalorder %s22, 1
      %p54 = por %p52, %p53
      %p55 = scmp.ne.s32.totalorder %s44, %s45
      %p56 = scmp.eq.s32.totalorder %s22, 0
      %p57 = por %p55, %p56
      %p58 = scmp.ne.s32.totalorder %s44, %s45
      %p59 = scmp.eq.s32.totalorder %s23, 1
      %p60 = por %p58, %p59
      %p62 = scmp.ne.s32.totalorder %s45, %s61
      %p63 = scmp.eq.s32.totalorder %s23, 0
      %p64 = por %p62, %p63
      %s65 = ssub.s32 %s24, %s36
      %p66 = scmp.eq.s32.totalorder %s65, 0
      %s68 = sadd.s32 %s67, 1
      %s69 = scalar_select %p66, %s67, %s68
      %p72 = pneg %p66
      %p73 = scmp.eq.s32.totalorder %s17, 1
      %p74 = por %p72, %p73
      %p75 = scmp.ne.s32.totalorder %s67, %s70
      %p76 = scmp.eq.s32.totalorder %s17, 0
      %p77 = por %p75, %p76
      %p78 = scmp.ne.s32.totalorder %s67, %s70
      %p79 = scmp.eq.s32.totalorder %s22, 1
      %p80 = por %p78, %p79
      %p81 = scmp.ne.s32.totalorder %s70, %s71
      %p82 = scmp.eq.s32.totalorder %s22, 0
      %p83 = por %p81, %p82
      %p84 = scmp.ne.s32.totalorder %s70, %s71
      %p85 = scmp.eq.s32.totalorder %s23, 1
      %p86 = por %p84, %p85
      %p88 = scmp.ne.s32.totalorder %s71, %s87
      %p89 = scmp.eq.s32.totalorder %s23, 0
      %p90 = por %p88, %p89
      %s92 = sadd.s32 %s91, 1
      %p95 = scmp.eq.s32.totalorder %s17, 1
      %p96 = scmp.ne.s32.totalorder %s91, %s93
      %p97 = scmp.eq.s32.totalorder %s17, 0
      %p98 = por %p96, %p97
      %p99 = scmp.ne.s32.totalorder %s91, %s93
      %p100 = scmp.eq.s32.totalorder %s22, 1
      %p101 = por %p99, %p100
      %p102 = scmp.ne.s32.totalorder %s93, %s94
      %p103 = scmp.eq.s32.totalorder %s22, 0
      %p104 = por %p102, %p103
      %p105 = scmp.ne.s32.totalorder %s93, %s94
      %p106 = scmp.eq.s32.totalorder %s23, 1
      %p107 = por %p105, %p106
      %p109 = scmp.ne.s32.totalorder %s94, %s108
      %p110 = scmp.eq.s32.totalorder %s23, 0
      %p111 = por %p109, %p110
      %s113 = sadd.s32 %s112, 1
      %p116 = scmp.eq.s32.totalorder %s17, 1
      %p117 = scmp.ne.s32.totalorder %s112, %s114
      %p118 = scmp.eq.s32.totalorder %s17, 0
      %p119 = por %p117, %p118
      %p120 = scmp.ne.s32.totalorder %s112, %s114
      %p121 = scmp.eq.s32.totalorder %s22, 1
      %p122 = por %p120, %p121
      %p123 = scmp.ne.s32.totalorder %s114, %s115
      %p124 = scmp.eq.s32.totalorder %s22, 0
      %p125 = por %p123, %p124
      %p126 = scmp.ne.s32.totalorder %s114, %s115
      %p127 = scmp.eq.s32.totalorder %s23, 1
      %p128 = por %p126, %p127
      %p130 = scmp.ne.s32.totalorder %s115, %s129
      %p131 = scmp.eq.s32.totalorder %s23, 0
      %p132 = por %p130, %p131
      %s133 = ssub.s32 %s24, %s36
      %s134 = ssub.s32 %s25, %s32
      %s135 = sor.u32 %s133, %s134
      %p136 = scmp.eq.s32.totalorder %s135, 0
      %s138 = sadd.s32 %s137, 1
      %s139 = scalar_select %p136, %s137, %s138
      %p142 = pneg %p136
      %p143 = scmp.eq.s32.totalorder %s17, 1
      %p144 = por %p142, %p143
      %p145 = scmp.ne.s32.totalorder %s137, %s140
      %p146 = scmp.eq.s32.totalorder %s17, 0
      %p147 = por %p145, %p146
      %p148 = scmp.ne.s32.totalorder %s137, %s140
      %p149 = scmp.eq.s32.totalorder %s22, 1
      %p150 = por %p148, %p149
      %p151 = scmp.ne.s32.totalorder %s140, %s141
      %p152 = scmp.eq.s32.totalorder %s22, 0
      %p153 = por %p151, %p152
      %p154 = scmp.ne.s32.totalorder %s140, %s141
      %p155 = scmp.eq.s32.totalorder %s23, 1
      %p156 = por %p154, %p155
      %p158 = scmp.ne.s32.totalorder %s141, %s157
      %p159 = scmp.eq.s32.totalorder %s23, 0
      %p160 = por %p158, %p159
      %p161 = scmp.le.s32.totalorder 1, %s17
      %p162 = scmp.lt.s32.totalorder %s17, 3
      %p163 = pnand %p161, %p162
      %p164 = pneg %p163
      // Predicated region
      $region9: #{tpu_custom_call.1} parent=5 // pred_check
        _
      $region10: #{tpu_custom_call.1} parent=5 // pred_check_branch
        %166 = sbr.rel (%p163) target = $region12
      $region11: #{tpu_custom_call.1} parent=5 // pred_region
        %s167 = ssub.s32 %s17, 1
        // Predicated region
        $region13: #{tpu_custom_call.1} parent=11 // pred_check
          %p168 = pneg %p83
        $region14: #{tpu_custom_call.1} parent=11 // pred_check_branch
          %170 = sbr.rel (%p168) target = $region16
        $region15: #{tpu_custom_call.1} parent=11 // pred_region
          %s172 = ssub.s32 2048, 2048
          %173 = vsyncadd [#allocation6], %s172
          %s174 = smul.addr %s26, 16
          %s175 = smul.addr %s174, 128
          %s176 = scalar_lea.hbm %s1, %s175
          %s177 = sshll.u32 [#allocation5], 4
          %s178 = int_to_ptr.vmem [resolvable:$true] %s177
          %183 = dma.hbm_to_vmem [thread:$0]  %s176, 2048, %s178, [#allocation6], 128, 128, 8
        $region16: #{tpu_custom_call.1} parent=11 // pred_fallthru
          _
        // Predicated region
        $region17: #{tpu_custom_call.1} parent=11 // pred_check
          %p184 = pneg %p104
        $region18: #{tpu_custom_call.1} parent=11 // pred_check_branch
          %186 = sbr.rel (%p184) target = $region20
        $region19: #{tpu_custom_call.1} parent=11 // pred_region
          %s188 = ssub.s32 2048, 2048
          %189 = vsyncadd [#allocation6], %s188
          %s190 = sshll.u32 [#allocation7], 4
          %s191 = int_to_ptr.vmem [resolvable:$true] %s190
          %196 = dma.hbm_to_vmem [thread:$0]  %s2, 2048, %s191, [#allocation6], 128, 128, 8
        $region20: #{tpu_custom_call.1} parent=11 // pred_fallthru
          _
        // Predicated region
        $region21: #{tpu_custom_call.1} parent=11 // pred_check
          %p197 = pneg %p125
        $region22: #{tpu_custom_call.1} parent=11 // pred_check_branch
          %199 = sbr.rel (%p197) target = $region24
        $region23: #{tpu_custom_call.1} parent=11 // pred_region
          _
        $region24: #{tpu_custom_call.1} parent=11 // pred_fallthru
          _
      $region12: #{tpu_custom_call.1} parent=5 // pred_fallthru
        _
      %p200 = scmp.lt.s32.totalorder %s17, 2
      // Predicated region
      $region25: #{tpu_custom_call.1} parent=5 // pred_check
        %p201 = pneg %p200
      $region26: #{tpu_custom_call.1} parent=5 // pred_check_branch
        %203 = sbr.rel (%p201) target = $region28
      $region27: #{tpu_custom_call.1} parent=5 // pred_region
        // Predicated region
        $region29: #{tpu_custom_call.1} parent=27 // pred_check
          %p204 = pneg %p51
        $region30: #{tpu_custom_call.1} parent=27 // pred_check_branch
          %206 = sbr.rel (%p204) target = $region32
        $region31: #{tpu_custom_call.1} parent=27 // pred_region
          %s207 = sand.u32 %s41, 1
          %s208 = scalar_lea.sflag [#allocation3], %s207
          %s209 = sand.u32 %s41, 1
          %s210 = smul.addr %s209, 128
          %s211 = scalar_lea.vmem [#allocation2], %s210
          %s212 = smul.u32 16, %s25
          %s214 = ssub.s32 2048, 2048
          %215 = vsyncadd %s208, %s214
          %s216 = smul.addr %s24, 16
          %s217 = sadd.s32 %s212, %s216
          %s218 = smul.addr %s217, 128
          %s219 = scalar_lea.hbm %s0, %s218
          %s220 = sshll.u32 %s211, 4
          %s221 = int_to_ptr.vmem [resolvable:$true] %s220
          %226 = dma.hbm_to_vmem [thread:$0]  %s219, 2048, %s221, %s208, 128, 128, 8
        $region32: #{tpu_custom_call.1} parent=27 // pred_fallthru
          _
      $region28: #{tpu_custom_call.1} parent=5 // pred_fallthru
        _
      %p227 = scmp.le.s32.totalorder 1, %s17
      %p228 = scmp.lt.s32.totalorder %s17, 3
      %p229 = pnand %p227, %p228
      %p230 = pneg %p229
      // Predicated region
      $region33: #{tpu_custom_call.1} parent=5 // pred_check
        _
      $region34: #{tpu_custom_call.1} parent=5 // pred_check_branch
        %232 = sbr.rel (%p229) target = $region36
      $region35: #{tpu_custom_call.1} parent=5 // pred_region
        %s233 = ssub.s32 %s17, 1
        %s234 = sand.u32 %s44, 1
        %s235 = scalar_lea.sflag [#allocation3], %s234
        %s236 = sand.u32 %s44, 1
        %s237 = smul.addr %s236, 128
        %s238 = scalar_lea.vmem [#allocation2], %s237
        // Predicated region
        $region37: #{tpu_custom_call.1} parent=35 // pred_check
          %p239 = pneg %p57
        $region38: #{tpu_custom_call.1} parent=35 // pred_check_branch
          %241 = sbr.rel (%p239) target = $region40
        $region39: #{tpu_custom_call.1} parent=35 // pred_region
          %242 = dma.done %s235, 2048
        $region40: #{tpu_custom_call.1} parent=35 // pred_fallthru
          _
        // Predicated region
        $region41: #{tpu_custom_call.1} parent=35 // pred_check
          %p243 = pneg %p83
        $region42: #{tpu_custom_call.1} parent=35 // pred_check_branch
          %245 = sbr.rel (%p243) target = $region44
        $region43: #{tpu_custom_call.1} parent=35 // pred_region
          %246 = dma.done [#allocation6], 2048
        $region44: #{tpu_custom_call.1} parent=35 // pred_fallthru
          _
        // Predicated region
        $region45: #{tpu_custom_call.1} parent=35 // pred_check
          %p247 = pneg %p104
        $region46: #{tpu_custom_call.1} parent=35 // pred_check_branch
          %249 = sbr.rel (%p247) target = $region48
        $region47: #{tpu_custom_call.1} parent=35 // pred_region
          %250 = dma.done [#allocation6], 2048
        $region48: #{tpu_custom_call.1} parent=35 // pred_fallthru
          _
        %s251 = sand.u32 %s44, 1
        %s252 = scalar_lea.sflag [#allocation3], %s251
        %s253 = sand.u32 %s44, 1
        %s254 = smul.addr %s253, 128
        %s255 = scalar_lea.vmem [#allocation2], %s254
        %p256 = pneg %p57
        %p257 = pneg %p54
        %p258 = pneg %p83
        %p259 = pneg %p80
        %p260 = pneg %p104
        %p261 = pneg %p101
        %p262 = pneg %p125
        %p263 = pneg %p122
        %p264 = pneg %p153
        %p265 = pneg %p150
        %s266 = sand.u32 %s140, 1
        %s267 = scalar_lea.sflag [#allocation4], %s266
        %s268 = sand.u32 %s140, 1
        %s269 = smul.addr %s268, 128
        %s270 = scalar_lea.vmem [#allocation8], %s269
        %s271 = smul.u32 16, %s27
        %s272 = smul.u32 16, %s27
        %v273 = vld [vmem:[%s238] sm:$0xff]
        %v274 = vld [vmem:[%s238 + $0x8] sm:$0xff]
        %v275 = vld [vmem:[%s238 + $0x10] sm:$0xff]
        %v276 = vld [vmem:[%s238 + $0x18] sm:$0xff]
        %v277 = vld [vmem:[%s238 + $0x20] sm:$0xff]
        %v278 = vld [vmem:[%s238 + $0x28] sm:$0xff]
        %v279 = vld [vmem:[%s238 + $0x30] sm:$0xff]
        %v280 = vld [vmem:[%s238 + $0x38] sm:$0xff]
        %v281 = vld [vmem:[%s238 + $0x40] sm:$0xff]
        %v282 = vld [vmem:[%s238 + $0x48] sm:$0xff]
        %v283 = vld [vmem:[%s238 + $0x50] sm:$0xff]
        %v284 = vld [vmem:[%s238 + $0x58] sm:$0xff]
        %v285 = vld [vmem:[%s238 + $0x60] sm:$0xff]
        %v286 = vld [vmem:[%s238 + $0x68] sm:$0xff]
        %v287 = vld [vmem:[%s238 + $0x70] sm:$0xff]
        %v288 = vld [vmem:[%s238 + $0x78] sm:$0xff]
        %v289 = vld [vmem:[#allocation5] sm:$0xff]
        %v290 = vld [vmem:[#allocation5 + $0x8] sm:$0xff]
        %v291 = vld [vmem:[#allocation5 + $0x10] sm:$0xff]
        %v292 = vld [vmem:[#allocation5 + $0x18] sm:$0xff]
        %v293 = vld [vmem:[#allocation5 + $0x20] sm:$0xff]
        %v294 = vld [vmem:[#allocation5 + $0x28] sm:$0xff]
        %v295 = vld [vmem:[#allocation5 + $0x30] sm:$0xff]
        %v296 = vld [vmem:[#allocation5 + $0x38] sm:$0xff]
        %v297 = vld [vmem:[#allocation5 + $0x40] sm:$0xff]
        %v298 = vld [vmem:[#allocation5 + $0x48] sm:$0xff]
        %v299 = vld [vmem:[#allocation5 + $0x50] sm:$0xff]
        %v300 = vld [vmem:[#allocation5 + $0x58] sm:$0xff]
        %v301 = vld [vmem:[#allocation5 + $0x60] sm:$0xff]
        %v302 = vld [vmem:[#allocation5 + $0x68] sm:$0xff]
        %v303 = vld [vmem:[#allocation5 + $0x70] sm:$0xff]
        %v304 = vld [vmem:[#allocation5 + $0x78] sm:$0xff]
        %305 = vmatprep.subr.mxu0 0.0
        %306 = vmatpush1.msra.mxu0 %v289
        %307 = vmatprep.subr.mxu0 0.0
        %308 = vmatpush1.msra.mxu0 %v290
        %309 = vmatprep.subr.mxu0 0.0
        %310 = vmatpush1.msra.mxu0 %v291
        %311 = vmatprep.subr.mxu0 0.0
        %312 = vmatpush1.msra.mxu0 %v292
        %313 = vmatprep.subr.mxu0 0.0
        %314 = vmatpush1.msra.mxu0 %v293
        %315 = vmatprep.subr.mxu0 0.0
        %316 = vmatpush1.msra.mxu0 %v294
        %317 = vmatprep.subr.mxu0 0.0
        %318 = vmatpush1.msra.mxu0 %v295
        %319 = vmatprep.subr.mxu0 0.0
        %320 = vmatpush1.msra.mxu0 %v296
        %321 = vmatprep.subr.mxu0 0.0
        %322 = vmatpush1.msra.mxu0 %v297
        %323 = vmatprep.subr.mxu0 0.0
        %324 = vmatpush1.msra.mxu0 %v298
        %325 = vmatprep.subr.mxu0 0.0
        %326 = vmatpush1.msra.mxu0 %v299
        %327 = vmatprep.subr.mxu0 0.0
        %328 = vmatpush1.msra.mxu0 %v300
        %329 = vmatprep.subr.mxu0 0.0
        %330 = vmatpush1.msra.mxu0 %v301
        %331 = vmatprep.subr.mxu0 0.0
        %332 = vmatpush1.msra.mxu0 %v302
        %333 = vmatprep.subr.mxu0 0.0
        %334 = vmatpush1.msra.mxu0 %v303
        %335 = vmatprep.subr.mxu0 0.0
        %336 = vmatpush1.msra.mxu0 %v304
        %337 = vmatprep.subr.mxu0 0.0
        %338 = vmatpush1.msra.mxu0 0.0
        %339 = vmatprep.subr.mxu0 0.0
        %340 = vmatpush1.msra.mxu0 0.0
        %341 = vmatprep.subr.mxu0 0.0
        %342 = vmatpush1.msra.mxu0 0.0
        %343 = vmatprep.subr.mxu0 0.0
        %344 = vmatpush1.msra.mxu0 0.0
        %345 = vmatprep.subr.mxu0 0.0
        %346 = vmatpush1.msra.mxu0 0.0
        %347 = vmatprep.subr.mxu0 0.0
        %348 = vmatpush1.msra.mxu0 0.0
        %349 = vmatprep.subr.mxu0 0.0
        %350 = vmatpush1.msra.mxu0 0.0
        %351 = vmatprep.subr.mxu0 0.0
        %352 = vmatpush1.msra.mxu0 0.0
        %353 = vmatprep.subr.mxu0 0.0
        %354 = vmatpush1.msra.mxu0 0.0
        %355 = vmatprep.subr.mxu0 0.0
        %356 = vmatpush1.msra.mxu0 0.0
        %357 = vmatprep.subr.mxu0 0.0
        %358 = vmatpush1.msra.mxu0 0.0
        %359 = vmatprep.subr.mxu0 0.0
        %360 = vmatpush1.msra.mxu0 0.0
        %361 = vmatprep.subr.mxu0 0.0
        %362 = vmatpush1.msra.mxu0 0.0
        %363 = vmatprep.subr.mxu0 0.0
        %364 = vmatpush1.msra.mxu0 0.0
        %365 = vmatprep.subr.mxu0 0.0
        %366 = vmatpush1.msra.mxu0 0.0
        %367 = vmatprep.subr.mxu0 0.0
        %368 = vmatpush1.msra.mxu0 0.0
        %369 = vmatprep.mubr.f32.mxu0 0.0
        %370 = vmatmul.mubr.f32.gmra.mrb[0].mxu0 %v273
        %v371 = vpop.f32.mrb[0].mxu0
        %v372 = vadd.f32 0.0, %v371
        %v373 = vpop.f32.mrb[0].mxu0
        %374 = vmatprep.mubr.f32.mxu0 0.0
        %375 = vmatmul.mubr.f32.gmra.mrb[0].mxu0 %v274
        %v376 = vpop.f32.mrb[0].mxu0
        %v377 = vadd.f32 0.0, %v376
        %v378 = vpop.f32.mrb[0].mxu0
        %379 = vmatprep.mubr.f32.mxu0 0.0
        %380 = vmatmul.mubr.f32.gmra.mrb[0].mxu0 %v275
        %v381 = vpop.f32.mrb[0].mxu0
        %v382 = vadd.f32 0.0, %v381
        %v383 = vpop.f32.mrb[0].mxu0
        %384 = vmatprep.mubr.f32.mxu0 0.0
        %385 = vmatmul.mubr.f32.gmra.mrb[0].mxu0 %v276
        %v386 = vpop.f32.mrb[0].mxu0
        %v387 = vadd.f32 0.0, %v386
        %v388 = vpop.f32.mrb[0].mxu0
        %389 = vmatprep.mubr.f32.mxu0 0.0
        %390 = vmatmul.mubr.f32.gmra.mrb[0].mxu0 %v277
        %v391 = vpop.f32.mrb[0].mxu0
        %v392 = vadd.f32 0.0, %v391
        %v393 = vpop.f32.mrb[0].mxu0
        %394 = vmatprep.mubr.f32.mxu0 0.0
        %395 = vmatmul.mubr.f32.gmra.mrb[0].mxu0 %v278
        %v396 = vpop.f32.mrb[0].mxu0
        %v397 = vadd.f32 0.0, %v396
        %v398 = vpop.f32.mrb[0].mxu0
        %399 = vmatprep.mubr.f32.mxu0 0.0
        %400 = vmatmul.mubr.f32.gmra.mrb[0].mxu0 %v279
        %v401 = vpop.f32.mrb[0].mxu0
        %v402 = vadd.f32 0.0, %v401
        %v403 = vpop.f32.mrb[0].mxu0
        %404 = vmatprep.mubr.f32.mxu0 0.0
        %405 = vmatmul.mubr.f32.gmra.mrb[0].mxu0 %v280
        %v406 = vpop.f32.mrb[0].mxu0
        %v407 = vadd.f32 0.0, %v406
        %v408 = vpop.f32.mrb[0].mxu0
        %409 = vmatprep.mubr.f32.mxu0 0.0
        %410 = vmatmul.mubr.f32.gmra.mrb[0].mxu0 %v281
        %v411 = vpop.f32.mrb[0].mxu0
        %v412 = vadd.f32 0.0, %v411
        %v413 = vpop.f32.mrb[0].mxu0
        %414 = vmatprep.mubr.f32.mxu0 0.0
        %415 = vmatmul.mubr.f32.gmra.mrb[0].mxu0 %v282
        %v416 = vpop.f32.mrb[0].mxu0
        %v417 = vadd.f32 0.0, %v416
        %v418 = vpop.f32.mrb[0].mxu0
        %419 = vmatprep.mubr.f32.mxu0 0.0
        %420 = vmatmul.mubr.f32.gmra.mrb[0].mxu0 %v283
        %v421 = vpop.f32.mrb[0].mxu0
        %v422 = vadd.f32 0.0, %v421
        %v423 = vpop.f32.mrb[0].mxu0
        %424 = vmatprep.mubr.f32.mxu0 0.0
        %425 = vmatmul.mubr.f32.gmra.mrb[0].mxu0 %v284
        %v426 = vpop.f32.mrb[0].mxu0
        %v427 = vadd.f32 0.0, %v426
        %v428 = vpop.f32.mrb[0].mxu0
        %429 = vmatprep.mubr.f32.mxu0 0.0
        %430 = vmatmul.mubr.f32.gmra.mrb[0].mxu0 %v285
        %v431 = vpop.f32.mrb[0].mxu0
        %v432 = vadd.f32 0.0, %v431
        %v433 = vpop.f32.mrb[0].mxu0
        %434 = vmatprep.mubr.f32.mxu0 0.0
        %435 = vmatmul.mubr.f32.gmra.mrb[0].mxu0 %v286
        %v436 = vpop.f32.mrb[0].mxu0
        %v437 = vadd.f32 0.0, %v436
        %v438 = vpop.f32.mrb[0].mxu0
        %439 = vmatprep.mubr.f32.mxu0 0.0
        %440 = vmatmul.mubr.f32.gmra.mrb[0].mxu0 %v287
        %v441 = vpop.f32.mrb[0].mxu0
        %v442 = vadd.f32 0.0, %v441
        %v443 = vpop.f32.mrb[0].mxu0
        %444 = vmatprep.mubr.f32.mxu0 0.0
        %445 = vmatmul.mubr.f32.gmra.mrb[0].mxu0 %v288
        %v446 = vpop.f32.mrb[0].mxu0
        %v447 = vadd.f32 0.0, %v446
        %v448 = vpop.f32.mrb[0].mxu0
        %449 = vdwg.mxu0
        %v450 = vld [vmem:[#allocation7] sm:$0xff]
        %v451 = vld [vmem:[#allocation7 + $0x8] sm:$0xff]
        %v452 = vld [vmem:[#allocation7 + $0x10] sm:$0xff]
        %v453 = vld [vmem:[#allocation7 + $0x18] sm:$0xff]
        %v454 = vld [vmem:[#allocation7 + $0x20] sm:$0xff]
        %v455 = vld [vmem:[#allocation7 + $0x28] sm:$0xff]
        %v456 = vld [vmem:[#allocation7 + $0x30] sm:$0xff]
        %v457 = vld [vmem:[#allocation7 + $0x38] sm:$0xff]
        %v458 = vld [vmem:[#allocation7 + $0x40] sm:$0xff]
        %v459 = vld [vmem:[#allocation7 + $0x48] sm:$0xff]
        %v460 = vld [vmem:[#allocation7 + $0x50] sm:$0xff]
        %v461 = vld [vmem:[#allocation7 + $0x58] sm:$0xff]
        %v462 = vld [vmem:[#allocation7 + $0x60] sm:$0xff]
        %v463 = vld [vmem:[#allocation7 + $0x68] sm:$0xff]
        %v464 = vld [vmem:[#allocation7 + $0x70] sm:$0xff]
        %v465 = vld [vmem:[#allocation7 + $0x78] sm:$0xff]
        %v466 = vld [vmem:[%s3] sm:$0x1]
        %v468 = vlaneseq
        %v469 = vshrl.u32 %v468, 7
        %v470 = vsub.s32 0, %v469
        %v471 = vrot.slane %v466, %v470
        %473 = vmatprep.subr.mxu0 0.0
        %474 = vmatpush1.msra.mxu0 %v450
        %475 = vmatprep.subr.mxu0 0.0
        %476 = vmatpush1.msra.mxu0 %v451
        %477 = vmatprep.subr.mxu0 0.0
        %478 = vmatpush1.msra.mxu0 %v452
        %479 = vmatprep.subr.mxu0 0.0
        %480 = vmatpush1.msra.mxu0 %v453
        %481 = vmatprep.subr.mxu0 0.0
        %482 = vmatpush1.msra.mxu0 %v454
        %483 = vmatprep.subr.mxu0 0.0
        %484 = vmatpush1.msra.mxu0 %v455
        %485 = vmatprep.subr.mxu0 0.0
        %486 = vmatpush1.msra.mxu0 %v456
        %487 = vmatprep.subr.mxu0 0.0
        %488 = vmatpush1.msra.mxu0 %v457
        %489 = vmatprep.subr.mxu0 0.0
        %490 = vmatpush1.msra.mxu0 %v458
        %491 = vmatprep.subr.mxu0 0.0
        %492 = vmatpush1.msra.mxu0 %v459
        %493 = vmatprep.subr.mxu0 0.0
        %494 = vmatpush1.msra.mxu0 %v460
        %495 = vmatprep.subr.mxu0 0.0
        %496 = vmatpush1.msra.mxu0 %v461
        %497 = vmatprep.subr.mxu0 0.0
        %498 = vmatpush1.msra.mxu0 %v462
        %499 = vmatprep.subr.mxu0 0.0
        %500 = vmatpush1.msra.mxu0 %v463
        %501 = vmatprep.subr.mxu0 0.0
        %502 = vmatpush1.msra.mxu0 %v464
        %503 = vmatprep.subr.mxu0 0.0
        %504 = vmatpush1.msra.mxu0 %v465
        %505 = vmatprep.subr.mxu0 0.0
        %506 = vmatpush1.msra.mxu0 0.0
        %507 = vmatprep.subr.mxu0 0.0
        %508 = vmatpush1.msra.mxu0 0.0
        %509 = vmatprep.subr.mxu0 0.0
        %510 = vmatpush1.msra.mxu0 0.0
        %511 = vmatprep.subr.mxu0 0.0
        %512 = vmatpush1.msra.mxu0 0.0
        %513 = vmatprep.subr.mxu0 0.0
        %514 = vmatpush1.msra.mxu0 0.0
        %515 = vmatprep.subr.mxu0 0.0
        %516 = vmatpush1.msra.mxu0 0.0
        %517 = vmatprep.subr.mxu0 0.0
        %518 = vmatpush1.msra.mxu0 0.0
        %519 = vmatprep.subr.mxu0 0.0
        %520 = vmatpush1.msra.mxu0 0.0
        %521 = vmatprep.subr.mxu0 0.0
        %522 = vmatpush1.msra.mxu0 0.0
        %523 = vmatprep.subr.mxu0 0.0
        %524 = vmatpush1.msra.mxu0 0.0
        %525 = vmatprep.subr.mxu0 0.0
        %526 = vmatpush1.msra.mxu0 0.0
        %527 = vmatprep.subr.mxu0 0.0
        %528 = vmatpush1.msra.mxu0 0.0
        %529 = vmatprep.subr.mxu0 0.0
        %530 = vmatpush1.msra.mxu0 0.0
        %531 = vmatprep.subr.mxu0 0.0
        %532 = vmatpush1.msra.mxu0 0.0
        %533 = vmatprep.subr.mxu0 0.0
        %534 = vmatpush1.msra.mxu0 0.0
        %535 = vmatprep.subr.mxu0 0.0
        %536 = vmatpush1.msra.mxu0 0.0
        %537 = vmatprep.mubr.f32.mxu0 0.0
        %538 = vmatmul.mubr.f32.gmra.mrb[0].mxu0 %v372
        %v539 = vpop.f32.mrb[0].mxu0
        %v540 = vadd.f32 %v471, %v539
        %v541 = vpop.f32.mrb[0].mxu0
        %542 = vmatprep.mubr.f32.mxu0 0.0
        %543 = vmatmul.mubr.f32.gmra.mrb[0].mxu0 %v377
        %v544 = vpop.f32.mrb[0].mxu0
        %v545 = vadd.f32 %v471, %v544
        %v546 = vpop.f32.mrb[0].mxu0
        %547 = vmatprep.mubr.f32.mxu0 0.0
        %548 = vmatmul.mubr.f32.gmra.mrb[0].mxu0 %v382
        %v549 = vpop.f32.mrb[0].mxu0
        %v550 = vadd.f32 %v471, %v549
        %v551 = vpop.f32.mrb[0].mxu0
        %552 = vmatprep.mubr.f32.mxu0 0.0
        %553 = vmatmul.mubr.f32.gmra.mrb[0].mxu0 %v387
        %v554 = vpop.f32.mrb[0].mxu0
        %v555 = vadd.f32 %v471, %v554
        %v556 = vpop.f32.mrb[0].mxu0
        %557 = vmatprep.mubr.f32.mxu0 0.0
        %558 = vmatmul.mubr.f32.gmra.mrb[0].mxu0 %v392
        %v559 = vpop.f32.mrb[0].mxu0
        %v560 = vadd.f32 %v471, %v559
        %v561 = vpop.f32.mrb[0].mxu0
        %562 = vmatprep.mubr.f32.mxu0 0.0
        %563 = vmatmul.mubr.f32.gmra.mrb[0].mxu0 %v397
        %v564 = vpop.f32.mrb[0].mxu0
        %v565 = vadd.f32 %v471, %v564
        %v566 = vpop.f32.mrb[0].mxu0
        %567 = vmatprep.mubr.f32.mxu0 0.0
        %568 = vmatmul.mubr.f32.gmra.mrb[0].mxu0 %v402
        %v569 = vpop.f32.mrb[0].mxu0
        %v570 = vadd.f32 %v471, %v569
        %v571 = vpop.f32.mrb[0].mxu0
        %572 = vmatprep.mubr.f32.mxu0 0.0
        %573 = vmatmul.mubr.f32.gmra.mrb[0].mxu0 %v407
        %v574 = vpop.f32.mrb[0].mxu0
        %v575 = vadd.f32 %v471, %v574
        %v576 = vpop.f32.mrb[0].mxu0
        %577 = vmatprep.mubr.f32.mxu0 0.0
        %578 = vmatmul.mubr.f32.gmra.mrb[0].mxu0 %v412
        %v579 = vpop.f32.mrb[0].mxu0
        %v580 = vadd.f32 %v471, %v579
        %v581 = vpop.f32.mrb[0].mxu0
        %582 = vmatprep.mubr.f32.mxu0 0.0
        %583 = vmatmul.mubr.f32.gmra.mrb[0].mxu0 %v417
        %v584 = vpop.f32.mrb[0].mxu0
        %v585 = vadd.f32 %v471, %v584
        %v586 = vpop.f32.mrb[0].mxu0
        %587 = vmatprep.mubr.f32.mxu0 0.0
        %588 = vmatmul.mubr.f32.gmra.mrb[0].mxu0 %v422
        %v589 = vpop.f32.mrb[0].mxu0
        %v590 = vadd.f32 %v471, %v589
        %v591 = vpop.f32.mrb[0].mxu0
        %592 = vmatprep.mubr.f32.mxu0 0.0
        %593 = vmatmul.mubr.f32.gmra.mrb[0].mxu0 %v427
        %v594 = vpop.f32.mrb[0].mxu0
        %v595 = vadd.f32 %v471, %v594
        %v596 = vpop.f32.mrb[0].mxu0
        %597 = vmatprep.mubr.f32.mxu0 0.0
        %598 = vmatmul.mubr.f32.gmra.mrb[0].mxu0 %v432
        %v599 = vpop.f32.mrb[0].mxu0
        %v600 = vadd.f32 %v471, %v599
        %v601 = vpop.f32.mrb[0].mxu0
        %602 = vmatprep.mubr.f32.mxu0 0.0
        %603 = vmatmul.mubr.f32.gmra.mrb[0].mxu0 %v437
        %v604 = vpop.f32.mrb[0].mxu0
        %v605 = vadd.f32 %v471, %v604
        %v606 = vpop.f32.mrb[0].mxu0
        %607 = vmatprep.mubr.f32.mxu0 0.0
        %608 = vmatmul.mubr.f32.gmra.mrb[0].mxu0 %v442
        %v609 = vpop.f32.mrb[0].mxu0
        %v610 = vadd.f32 %v471, %v609
        %v611 = vpop.f32.mrb[0].mxu0
        %612 = vmatprep.mubr.f32.mxu0 0.0
        %613 = vmatmul.mubr.f32.gmra.mrb[0].mxu0 %v447
        %v614 = vpop.f32.mrb[0].mxu0
        %v615 = vadd.f32 %v471, %v614
        %v616 = vpop.f32.mrb[0].mxu0
        %617 = vdwg.mxu0
        %618 = vst [vmem:[%s270] sm:$0xff] %v540
        %619 = vst [vmem:[%s270 + $0x8] sm:$0xff] %v545
        %620 = vst [vmem:[%s270 + $0x10] sm:$0xff] %v550
        %621 = vst [vmem:[%s270 + $0x18] sm:$0xff] %v555
        %622 = vst [vmem:[%s270 + $0x20] sm:$0xff] %v560
        %623 = vst [vmem:[%s270 + $0x28] sm:$0xff] %v565
        %624 = vst [vmem:[%s270 + $0x30] sm:$0xff] %v570
        %625 = vst [vmem:[%s270 + $0x38] sm:$0xff] %v575
        %626 = vst [vmem:[%s270 + $0x40] sm:$0xff] %v580
        %627 = vst [vmem:[%s270 + $0x48] sm:$0xff] %v585
        %628 = vst [vmem:[%s270 + $0x50] sm:$0xff] %v590
        %629 = vst [vmem:[%s270 + $0x58] sm:$0xff] %v595
        %630 = vst [vmem:[%s270 + $0x60] sm:$0xff] %v600
        %631 = vst [vmem:[%s270 + $0x68] sm:$0xff] %v605
        %632 = vst [vmem:[%s270 + $0x70] sm:$0xff] %v610
        %633 = vst [vmem:[%s270 + $0x78] sm:$0xff] %v615
        %s634 = sand.u32 %s140, 1
        %s635 = scalar_lea.sflag [#allocation4], %s634
        %s636 = sand.u32 %s140, 1
        %s637 = smul.addr %s636, 128
        %s638 = scalar_lea.vmem [#allocation8], %s637
        // Predicated region
        $region49: #{tpu_custom_call.1} parent=35 // pred_check
          %p639 = pneg %p150
        $region50: #{tpu_custom_call.1} parent=35 // pred_check_branch
          %641 = sbr.rel (%p639) target = $region52
        $region51: #{tpu_custom_call.1} parent=35 // pred_region
          %s642 = smul.u32 16, %s27
          %s644 = ssub.s32 2048, 2048
          %645 = vsyncadd %s635, %s644
          %s646 = smul.addr %s26, 16
          %s647 = sadd.s32 %s642, %s646
          %s648 = smul.addr %s647, 128
          %s649 = scalar_lea.hbm %s4, %s648
          %s650 = sshll.u32 %s638, 4
          %s651 = int_to_ptr.vmem [resolvable:$true] %s650
          %656 = dma.vmem_to_hbm [thread:$0]  %s651, 2048, %s649, %s635, 128, 128, 8
        $region52: #{tpu_custom_call.1} parent=35 // pred_fallthru
          _
      $region36: #{tpu_custom_call.1} parent=5 // pred_fallthru
        _
      %p657 = scmp.le.s32.totalorder 2, %s17
      // Predicated region
      $region53: #{tpu_custom_call.1} parent=5 // pred_check
        %p658 = pneg %p657
      $region54: #{tpu_custom_call.1} parent=5 // pred_check_branch
        %660 = sbr.rel (%p658) target = $region56
      $region55: #{tpu_custom_call.1} parent=5 // pred_region
        %s661 = ssub.s32 %s17, 2
        // Predicated region
        $region57: #{tpu_custom_call.1} parent=55 // pred_check
          %p662 = pneg %p156
        $region58: #{tpu_custom_call.1} parent=55 // pred_check_branch
          %664 = sbr.rel (%p662) target = $region60
        $region59: #{tpu_custom_call.1} parent=55 // pred_region
          %s665 = sand.u32 %s141, 1
          %s666 = scalar_lea.sflag [#allocation4], %s665
          %s667 = sand.u32 %s141, 1
          %s668 = smul.addr %s667, 128
          %s669 = scalar_lea.vmem [#allocation8], %s668
          %670 = dma.done %s666, 2048
        $region60: #{tpu_custom_call.1} parent=55 // pred_fallthru
          _
      $region56: #{tpu_custom_call.1} parent=5 // pred_fallthru
        _
    $region6: #{tpu_custom_call.1} parent=1 // loop_footer
      %s21 = sadd.s32 1, %s17
    $region7: #{tpu_custom_call.1} parent=1 // loop_footer_branch
      %16 = sbr.rel target = $region3
    $region8: #{tpu_custom_call.1} parent=1 // loop_exit
      _
    %671 = vsyncpa [#allocation3], 1
    %s672 = scalar_lea.sflag [#allocation3], 1
    %673 = vsyncpa %s672, 1
    %674 = vsyncpa [#allocation6], 1
    %675 = vsyncpa [#allocation4], 1
    %s676 = scalar_lea.sflag [#allocation4], 1
    %677 = vsyncpa %s676, 1

// kernel: tpu_custom_call.1
$region0: #{tpu_custom_call.1}
  #allocation0 [shape = 'u32[]', space=smem, size = 0x4, offset = 0x4, fixed_abs, tag = 'smem constant byte address 0x4 - core index']
  #allocation1 [shape = 'u32[144,128]{1,0:T(1,128)}', space=vmem, size = 0x12000, scoped, tag = 'internal scratch']
  %s0 = inlined_call_operand.hbm [shape: f32[2,128,128], index: 0, kind: input, shape index: {}]
  %s1 = inlined_call_operand.hbm [shape: f32[2,128,128], index: 1, kind: input, shape index: {}]
  %s2 = inlined_call_operand.hbm [shape: f32[128,128], index: 2, kind: input, shape index: {}]
  %s3 = inlined_call_operand.vmem [shape: f32[1,128], index: 3, kind: input, shape index: {}]
  %s4 = inlined_call_operand.hbm [shape: f32[2,128,128], index: 4, kind: output, shape index: {}]
  %s5 = sld [smem:[#allocation0]]
  $region61: #{tpu_custom_call.1} parent=0
    _
  %s7 = ssub.s32 1, %s5
  %s8 = scalar_select 0, %s7, %s5
  $region1: #{tpu_custom_call.1} parent=0
    #allocation2 [shape = 'u8[131072]{0}', space=vmem, size = 0x20000, scoped, tag = 'input window, operand 0']
    #allocation3 [shape = 's32[2]{0}', space=sflag, size = 0x8, scoped, tag = 'scoped memory for tpu_custom_call.1']
    #allocation4 [shape = 's32[2]{0}', space=sflag, size = 0x8, scoped, tag = 'scoped memory for tpu_custom_call.1']
    #allocation5 [shape = 'u8[131072]{0}', space=vmem, size = 0x20000, scoped, tag = 'input window, operand 1']
    #allocation6 [shape = 's32[2]{0}', space=sflag, size = 0x8, scoped, tag = 'scoped memory for tpu_custom_call.1']
    #allocation7 [shape = 'u8[65536]{0}', space=vmem, size = 0x10000, scoped, tag = 'input window, operand 2, single buffered']
    #allocation8 [shape = 'u8[131072]{0}', space=vmem, size = 0x20000, scoped, tag = 'output window, operand 0']
    %9 = vsyncpa [#allocation3], 0
    %s10 = scalar_lea.sflag [#allocation3], 1
    %11 = vsyncpa %s10, 0
    %12 = vsyncpa [#allocation6], 0
    %s13 = scalar_lea.sflag [#allocation6], 1
    %14 = vsyncpa %s13, 0
    %15 = vsyncpa [#allocation4], 0
    %s16 = scalar_lea.sflag [#allocation4], 1
    %17 = vsyncpa %s16, 0
    loop: start=0, step=1, limit=4
    $region2: #{tpu_custom_call.1} parent=1 // loop_pre_header
      _
    $region3: #{tpu_custom_call.1} parent=1 // loop_header
      %s19 = sphi 0, %s23
      %p20 = scmp.ge.s32.totalorder %s19, 4
      %s26 = sphi 0, %s38
      %s27 = sphi 0, %s34
      %s28 = sphi 0, %s26
      %s29 = sphi 0, %s27
      %s30 = sphi 0, %s28
      %s31 = sphi 0, %s29
      %s43 = sphi 0, %s45
      %s46 = sphi 0, %s43
      %s47 = sphi 0, %s46
      %s63 = sphi 0, %s47
      %s69 = sphi 0, %s71
      %s72 = sphi 0, %s69
      %s73 = sphi 0, %s72
      %s89 = sphi 0, %s73
      %s93 = sphi 0, %s93
      %s95 = sphi 0, %s93
      %s96 = sphi 0, %s95
      %s110 = sphi 0, %s96
      %s114 = sphi 0, %s114
      %s116 = sphi 0, %s114
      %s117 = sphi 0, %s116
      %s131 = sphi 0, %s117
      %s139 = sphi 0, %s141
      %s142 = sphi 0, %s139
      %s143 = sphi 0, %s142
      %s159 = sphi 0, %s143
    $region4: #{tpu_custom_call.1} parent=1 // loop_header_branch
      %22 = sbr.rel (%p20) target = $region8
    $region5: #{tpu_custom_call.1} parent=1 // loop_body
      %s24 = ssub.s32 %s19, 1
      %s25 = ssub.s32 %s19, 2
      %s32 = sadd.s32 1, %s27
      %p33 = scmp.ge.s32.totalorder %s32, 1
      %s34 = scalar_select %p33, 0, %s32
      %s35 = sadd.s32 1, %s26
      %s36 = scalar_select %p33, %s35, %s26
      %p37 = scmp.ge.s32.totalorder %s36, 2
      %s38 = scalar_select %p37, 0, %s36
      %s39 = ssub.s32 %s26, %s38
      %s40 = ssub.s32 %s27, %s34
      %s41 = sor.u32 %s39, %s40
      %p42 = scmp.eq.s32.totalorder %s41, 0
      %s44 = sadd.s32 %s43, 1
      %s45 = scalar_select %p42, %s43, %s44
      %p48 = pneg %p42
      %p49 = scmp.eq.s32.totalorder %s19, 1
      %p50 = por %p48, %p49
      %p51 = scmp.ne.s32.totalorder %s43, %s46
      %p52 = scmp.eq.s32.totalorder %s19, 0
      %p53 = por %p51, %p52
      %p54 = scmp.ne.s32.totalorder %s43, %s46
      %p55 = scmp.eq.s32.totalorder %s24, 1
      %p56 = por %p54, %p55
      %p57 = scmp.ne.s32.totalorder %s46, %s47
      %p58 = scmp.eq.s32.totalorder %s24, 0
      %p59 = por %p57, %p58
      %p60 = scmp.ne.s32.totalorder %s46, %s47
      %p61 = scmp.eq.s32.totalorder %s25, 1
      %p62 = por %p60, %p61
      %p64 = scmp.ne.s32.totalorder %s47, %s63
      %p65 = scmp.eq.s32.totalorder %s25, 0
      %p66 = por %p64, %p65
      %s67 = ssub.s32 %s26, %s38
      %p68 = scmp.eq.s32.totalorder %s67, 0
      %s70 = sadd.s32 %s69, 1
      %s71 = scalar_select %p68, %s69, %s70
      %p74 = pneg %p68
      %p75 = scmp.eq.s32.totalorder %s19, 1
      %p76 = por %p74, %p75
      %p77 = scmp.ne.s32.totalorder %s69, %s72
      %p78 = scmp.eq.s32.totalorder %s19, 0
      %p79 = por %p77, %p78
      %p80 = scmp.ne.s32.totalorder %s69, %s72
      %p81 = scmp.eq.s32.totalorder %s24, 1
      %p82 = por %p80, %p81
      %p83 = scmp.ne.s32.totalorder %s72, %s73
      %p84 = scmp.eq.s32.totalorder %s24, 0
      %p85 = por %p83, %p84
      %p86 = scmp.ne.s32.totalorder %s72, %s73
      %p87 = scmp.eq.s32.totalorder %s25, 1
      %p88 = por %p86, %p87
      %p90 = scmp.ne.s32.totalorder %s73, %s89
      %p91 = scmp.eq.s32.totalorder %s25, 0
      %p92 = por %p90, %p91
      %s94 = sadd.s32 %s93, 1
      %p97 = scmp.eq.s32.totalorder %s19, 1
      %p98 = scmp.ne.s32.totalorder %s93, %s95
      %p99 = scmp.eq.s32.totalorder %s19, 0
      %p100 = por %p98, %p99
      %p101 = scmp.ne.s32.totalorder %s93, %s95
      %p102 = scmp.eq.s32.totalorder %s24, 1
      %p103 = por %p101, %p102
      %p104 = scmp.ne.s32.totalorder %s95, %s96
      %p105 = scmp.eq.s32.totalorder %s24, 0
      %p106 = por %p104, %p105
      %p107 = scmp.ne.s32.totalorder %s95, %s96
      %p108 = scmp.eq.s32.totalorder %s25, 1
      %p109 = por %p107, %p108
      %p111 = scmp.ne.s32.totalorder %s96, %s110
      %p112 = scmp.eq.s32.totalorder %s25, 0
      %p113 = por %p111, %p112
      %s115 = sadd.s32 %s114, 1
      %p118 = scmp.eq.s32.totalorder %s19, 1
      %p119 = scmp.ne.s32.totalorder %s114, %s116
      %p120 = scmp.eq.s32.totalorder %s19, 0
      %p121 = por %p119, %p120
      %p122 = scmp.ne.s32.totalorder %s114, %s116
      %p123 = scmp.eq.s32.totalorder %s24, 1
      %p124 = por %p122, %p123
      %p125 = scmp.ne.s32.totalorder %s116, %s117
      %p126 = scmp.eq.s32.totalorder %s24, 0
      %p127 = por %p125, %p126
      %p128 = scmp.ne.s32.totalorder %s116, %s117
      %p129 = scmp.eq.s32.totalorder %s25, 1
      %p130 = por %p128, %p129
      %p132 = scmp.ne.s32.totalorder %s117, %s131
      %p133 = scmp.eq.s32.totalorder %s25, 0
      %p134 = por %p132, %p133
      %s135 = ssub.s32 %s26, %s38
      %s136 = ssub.s32 %s27, %s34
      %s137 = sor.u32 %s135, %s136
      %p138 = scmp.eq.s32.totalorder %s137, 0
      %s140 = sadd.s32 %s139, 1
      %s141 = scalar_select %p138, %s139, %s140
      %p144 = pneg %p138
      %p145 = scmp.eq.s32.totalorder %s19, 1
      %p146 = por %p144, %p145
      %p147 = scmp.ne.s32.totalorder %s139, %s142
      %p148 = scmp.eq.s32.totalorder %s19, 0
      %p149 = por %p147, %p148
      %p150 = scmp.ne.s32.totalorder %s139, %s142
      %p151 = scmp.eq.s32.totalorder %s24, 1
      %p152 = por %p150, %p151
      %p153 = scmp.ne.s32.totalorder %s142, %s143
      %p154 = scmp.eq.s32.totalorder %s24, 0
      %p155 = por %p153, %p154
      %p156 = scmp.ne.s32.totalorder %s142, %s143
      %p157 = scmp.eq.s32.totalorder %s25, 1
      %p158 = por %p156, %p157
      %p160 = scmp.ne.s32.totalorder %s143, %s159
      %p161 = scmp.eq.s32.totalorder %s25, 0
      %p162 = por %p160, %p161
      %p163 = scmp.le.s32.totalorder 1, %s19
      %p164 = scmp.lt.s32.totalorder %s19, 3
      %p165 = pnand %p163, %p164
      %p166 = pneg %p165
      // Predicated region
      $region9: #{tpu_custom_call.1} parent=5 // pred_check
        _
      $region10: #{tpu_custom_call.1} parent=5 // pred_check_branch
        %168 = sbr.rel (%p165) target = $region12
      $region11: #{tpu_custom_call.1} parent=5 // pred_region
        %s169 = ssub.s32 %s19, 1
        // Predicated region
        $region13: #{tpu_custom_call.1} parent=11 // pred_check
          %p170 = pneg %p106
        $region14: #{tpu_custom_call.1} parent=11 // pred_check_branch
          %172 = sbr.rel (%p170) target = $region16
        $region15: #{tpu_custom_call.1} parent=11 // pred_region
          %s174 = ssub.s32 2048, 2048
          %175 = vsyncadd [#allocation6], %s174
          %s176 = sshll.u32 [#allocation7], 4
          %s177 = int_to_ptr.vmem [resolvable:$true] %s176
          %182 = dma.hbm_to_vmem [thread:$0]  %s2, 2048, %s177, [#allocation6], 128, 128, 8
        $region16: #{tpu_custom_call.1} parent=11 // pred_fallthru
          _
        // Predicated region
        $region17: #{tpu_custom_call.1} parent=11 // pred_check
          %p183 = pneg %p127
        $region18: #{tpu_custom_call.1} parent=11 // pred_check_branch
          %185 = sbr.rel (%p183) target = $region20
        $region19: #{tpu_custom_call.1} parent=11 // pred_region
          _
        $region20: #{tpu_custom_call.1} parent=11 // pred_fallthru
          _
      $region12: #{tpu_custom_call.1} parent=5 // pred_fallthru
        _
      %p186 = scmp.lt.s32.totalorder %s19, 2
      // Predicated region
      $region21: #{tpu_custom_call.1} parent=5 // pred_check
        %p187 = pneg %p186
      $region22: #{tpu_custom_call.1} parent=5 // pred_check_branch
        %189 = sbr.rel (%p187) target = $region24
      $region23: #{tpu_custom_call.1} parent=5 // pred_region
        // Predicated region
        $region25: #{tpu_custom_call.1} parent=23 // pred_check
          %p190 = pneg %p53
        $region26: #{tpu_custom_call.1} parent=23 // pred_check_branch
          %192 = sbr.rel (%p190) target = $region28
        $region27: #{tpu_custom_call.1} parent=23 // pred_region
          %s193 = sand.u32 %s43, 1
          %s194 = scalar_lea.sflag [#allocation3], %s193
          %s195 = sand.u32 %s43, 1
          %s196 = smul.addr %s195, 128
          %s197 = scalar_lea.vmem [#allocation2], %s196
          %s198 = smul.u32 16, %s27
          %s200 = ssub.s32 2048, 2048
          %201 = vsyncadd %s194, %s200
          %s202 = smul.addr %s26, 16
          %s203 = sadd.s32 %s198, %s202
          %s204 = smul.addr %s203, 128
          %s205 = scalar_lea.hbm %s0, %s204
          %s206 = sshll.u32 %s197, 4
          %s207 = int_to_ptr.vmem [resolvable:$true] %s206
          %212 = dma.hbm_to_vmem [thread:$0]  %s205, 2048, %s207, %s194, 128, 128, 8
        $region28: #{tpu_custom_call.1} parent=23 // pred_fallthru
          _
        // Predicated region
        $region29: #{tpu_custom_call.1} parent=23 // pred_check
          %p213 = pneg %p79
        $region30: #{tpu_custom_call.1} parent=23 // pred_check_branch
          %215 = sbr.rel (%p213) target = $region32
        $region31: #{tpu_custom_call.1} parent=23 // pred_region
          %s216 = sand.u32 %s19, 1
          %s217 = scalar_lea.sflag [#allocation6], %s216
          %s218 = sand.u32 %s69, 1
          %s219 = smul.addr %s218, 128
          %s220 = scalar_lea.vmem [#allocation5], %s219
          %s222 = ssub.s32 2048, 2048
          %223 = vsyncadd %s217, %s222
          %s224 = smul.addr %s26, 16
          %s225 = smul.addr %s224, 128
          %s226 = scalar_lea.hbm %s1, %s225
          %s227 = sshll.u32 %s220, 4
          %s228 = int_to_ptr.vmem [resolvable:$true] %s227
          %233 = dma.hbm_to_vmem [thread:$0]  %s226, 2048, %s228, %s217, 128, 128, 8
        $region32: #{tpu_custom_call.1} parent=23 // pred_fallthru
          _
      $region24: #{tpu_custom_call.1} parent=5 // pred_fallthru
        _
      %p234 = scmp.le.s32.totalorder 1, %s19
      %p235 = scmp.lt.s32.totalorder %s19, 3
      %p236 = pnand %p234, %p235
      %p237 = pneg %p236
      // Predicated region
      $region33: #{tpu_custom_call.1} parent=5 // pred_check
        _
      $region34: #{tpu_custom_call.1} parent=5 // pred_check_branch
        %239 = sbr.rel (%p236) target = $region36
      $region35: #{tpu_custom_call.1} parent=5 // pred_region
        %s240 = ssub.s32 %s19, 1
        %s241 = sand.u32 %s46, 1
        %s242 = scalar_lea.sflag [#allocation3], %s241
        %s243 = sand.u32 %s46, 1
        %s244 = smul.addr %s243, 128
        %s245 = scalar_lea.vmem [#allocation2], %s244
        // Predicated region
        $region37: #{tpu_custom_call.1} parent=35 // pred_check
          %p246 = pneg %p59
        $region38: #{tpu_custom_call.1} parent=35 // pred_check_branch
          %248 = sbr.rel (%p246) target = $region40
        $region39: #{tpu_custom_call.1} parent=35 // pred_region
          %249 = dma.done %s242, 2048
        $region40: #{tpu_custom_call.1} parent=35 // pred_fallthru
          _
        %s250 = sand.u32 %s24, 1
        %s251 = scalar_lea.sflag [#allocation6], %s250
        %s252 = sand.u32 %s72, 1
        %s253 = smul.addr %s252, 128
        %s254 = scalar_lea.vmem [#allocation5], %s253
        // Predicated region
        $region41: #{tpu_custom_call.1} parent=35 // pred_check
          %p255 = pneg %p85
        $region42: #{tpu_custom_call.1} parent=35 // pred_check_branch
          %257 = sbr.rel (%p255) target = $region44
        $region43: #{tpu_custom_call.1} parent=35 // pred_region
          %258 = dma.done %s251, 2048
        $region44: #{tpu_custom_call.1} parent=35 // pred_fallthru
          _
        // Predicated region
        $region45: #{tpu_custom_call.1} parent=35 // pred_check
          %p259 = pneg %p106
        $region46: #{tpu_custom_call.1} parent=35 // pred_check_branch
          %261 = sbr.rel (%p259) target = $region48
        $region47: #{tpu_custom_call.1} parent=35 // pred_region
          %262 = dma.done [#allocation6], 2048
        $region48: #{tpu_custom_call.1} parent=35 // pred_fallthru
          _
        %s263 = sand.u32 %s46, 1
        %s264 = scalar_lea.sflag [#allocation3], %s263
        %s265 = sand.u32 %s46, 1
        %s266 = smul.addr %s265, 128
        %s267 = scalar_lea.vmem [#allocation2], %s266
        %p268 = pneg %p59
        %p269 = pneg %p56
        %s270 = sand.u32 %s24, 1
        %s271 = scalar_lea.sflag [#allocation6], %s270
        %s272 = sand.u32 %s72, 1
        %s273 = smul.addr %s272, 128
        %s274 = scalar_lea.vmem [#allocation5], %s273
        %p275 = pneg %p85
        %p276 = pneg %p82
        %p277 = pneg %p106
        %p278 = pneg %p103
        %p279 = pneg %p127
        %p280 = pneg %p124
        %p281 = pneg %p155
        %p282 = pneg %p152
        %s283 = sand.u32 %s142, 1
        %s284 = scalar_lea.sflag [#allocation4], %s283
        %s285 = sand.u32 %s142, 1
        %s286 = smul.addr %s285, 128
        %s287 = scalar_lea.vmem [#allocation8], %s286
        %s288 = smul.u32 16, %s29
        %s289 = smul.u32 16, %s29
        %v290 = vld [vmem:[%s245] sm:$0xff]
        %v291 = vld [vmem:[%s245 + $0x8] sm:$0xff]
        %v292 = vld [vmem:[%s245 + $0x10] sm:$0xff]
        %v293 = vld [vmem:[%s245 + $0x18] sm:$0xff]
        %v294 = vld [vmem:[%s245 + $0x20] sm:$0xff]
        %v295 = vld [vmem:[%s245 + $0x28] sm:$0xff]
        %v296 = vld [vmem:[%s245 + $0x30] sm:$0xff]
        %v297 = vld [vmem:[%s245 + $0x38] sm:$0xff]
        %v298 = vld [vmem:[%s245 + $0x40] sm:$0xff]
        %v299 = vld [vmem:[%s245 + $0x48] sm:$0xff]
        %v300 = vld [vmem:[%s245 + $0x50] sm:$0xff]
        %v301 = vld [vmem:[%s245 + $0x58] sm:$0xff]
        %v302 = vld [vmem:[%s245 + $0x60] sm:$0xff]
        %v303 = vld [vmem:[%s245 + $0x68] sm:$0xff]
        %v304 = vld [vmem:[%s245 + $0x70] sm:$0xff]
        %v305 = vld [vmem:[%s245 + $0x78] sm:$0xff]
        %v306 = vld [vmem:[%s254] sm:$0xff]
        %v307 = vld [vmem:[%s254 + $0x8] sm:$0xff]
        %v308 = vld [vmem:[%s254 + $0x10] sm:$0xff]
        %v309 = vld [vmem:[%s254 + $0x18] sm:$0xff]
        %v310 = vld [vmem:[%s254 + $0x20] sm:$0xff]
        %v311 = vld [vmem:[%s254 + $0x28] sm:$0xff]
        %v312 = vld [vmem:[%s254 + $0x30] sm:$0xff]
        %v313 = vld [vmem:[%s254 + $0x38] sm:$0xff]
        %v314 = vld [vmem:[%s254 + $0x40] sm:$0xff]
        %v315 = vld [vmem:[%s254 + $0x48] sm:$0xff]
        %v316 = vld [vmem:[%s254 + $0x50] sm:$0xff]
        %v317 = vld [vmem:[%s254 + $0x58] sm:$0xff]
        %v318 = vld [vmem:[%s254 + $0x60] sm:$0xff]
        %v319 = vld [vmem:[%s254 + $0x68] sm:$0xff]
        %v320 = vld [vmem:[%s254 + $0x70] sm:$0xff]
        %v321 = vld [vmem:[%s254 + $0x78] sm:$0xff]
        %322 = vmatprep.subr.mxu0 0.0
        %323 = vmatpush1.msra.mxu0 %v306
        %324 = vmatprep.subr.mxu0 0.0
        %325 = vmatpush1.msra.mxu0 %v307
        %326 = vmatprep.subr.mxu0 0.0
        %327 = vmatpush1.msra.mxu0 %v308
        %328 = vmatprep.subr.mxu0 0.0
        %329 = vmatpush1.msra.mxu0 %v309
        %330 = vmatprep.subr.mxu0 0.0
        %331 = vmatpush1.msra.mxu0 %v310
        %332 = vmatprep.subr.mxu0 0.0
        %333 = vmatpush1.msra.mxu0 %v311
        %334 = vmatprep.subr.mxu0 0.0
        %335 = vmatpush1.msra.mxu0 %v312
        %336 = vmatprep.subr.mxu0 0.0
        %337 = vmatpush1.msra.mxu0 %v313
        %338 = vmatprep.subr.mxu0 0.0
        %339 = vmatpush1.msra.mxu0 %v314
        %340 = vmatprep.subr.mxu0 0.0
        %341 = vmatpush1.msra.mxu0 %v315
        %342 = vmatprep.subr.mxu0 0.0
        %343 = vmatpush1.msra.mxu0 %v316
        %344 = vmatprep.subr.mxu0 0.0
        %345 = vmatpush1.msra.mxu0 %v317
        %346 = vmatprep.subr.mxu0 0.0
        %347 = vmatpush1.msra.mxu0 %v318
        %348 = vmatprep.subr.mxu0 0.0
        %349 = vmatpush1.msra.mxu0 %v319
        %350 = vmatprep.subr.mxu0 0.0
        %351 = vmatpush1.msra.mxu0 %v320
        %352 = vmatprep.subr.mxu0 0.0
        %353 = vmatpush1.msra.mxu0 %v321
        %354 = vmatprep.subr.mxu0 0.0
        %355 = vmatpush1.msra.mxu0 0.0
        %356 = vmatprep.subr.mxu0 0.0
        %357 = vmatpush1.msra.mxu0 0.0
        %358 = vmatprep.subr.mxu0 0.0
        %359 = vmatpush1.msra.mxu0 0.0
        %360 = vmatprep.subr.mxu0 0.0
        %361 = vmatpush1.msra.mxu0 0.0
        %362 = vmatprep.subr.mxu0 0.0
        %363 = vmatpush1.msra.mxu0 0.0
        %364 = vmatprep.subr.mxu0 0.0
        %365 = vmatpush1.msra.mxu0 0.0
        %366 = vmatprep.subr.mxu0 0.0
        %367 = vmatpush1.msra.mxu0 0.0
        %368 = vmatprep.subr.mxu0 0.0
        %369 = vmatpush1.msra.mxu0 0.0
        %370 = vmatprep.subr.mxu0 0.0
        %371 = vmatpush1.msra.mxu0 0.0
        %372 = vmatprep.subr.mxu0 0.0
        %373 = vmatpush1.msra.mxu0 0.0
        %374 = vmatprep.subr.mxu0 0.0
        %375 = vmatpush1.msra.mxu0 0.0
        %376 = vmatprep.subr.mxu0 0.0
        %377 = vmatpush1.msra.mxu0 0.0
        %378 = vmatprep.subr.mxu0 0.0
        %379 = vmatpush1.msra.mxu0 0.0
        %380 = vmatprep.subr.mxu0 0.0
        %381 = vmatpush1.msra.mxu0 0.0
        %382 = vmatprep.subr.mxu0 0.0
        %383 = vmatpush1.msra.mxu0 0.0
        %384 = vmatprep.subr.mxu0 0.0
        %385 = vmatpush1.msra.mxu0 0.0
        %386 = vmatprep.mubr.f32.mxu0 0.0
        %387 = vmatmul.mubr.f32.gmra.mrb[0].mxu0 %v290
        %v388 = vpop.f32.mrb[0].mxu0
        %v389 = vadd.f32 0.0, %v388
        %v390 = vpop.f32.mrb[0].mxu0
        %391 = vmatprep.mubr.f32.mxu0 0.0
        %392 = vmatmul.mubr.f32.gmra.mrb[0].mxu0 %v291
        %v393 = vpop.f32.mrb[0].mxu0
        %v394 = vadd.f32 0.0, %v393
        %v395 = vpop.f32.mrb[0].mxu0
        %396 = vmatprep.mubr.f32.mxu0 0.0
        %397 = vmatmul.mubr.f32.gmra.mrb[0].mxu0 %v292
        %v398 = vpop.f32.mrb[0].mxu0
        %v399 = vadd.f32 0.0, %v398
        %v400 = vpop.f32.mrb[0].mxu0
        %401 = vmatprep.mubr.f32.mxu0 0.0
        %402 = vmatmul.mubr.f32.gmra.mrb[0].mxu0 %v293
        %v403 = vpop.f32.mrb[0].mxu0
        %v404 = vadd.f32 0.0, %v403
        %v405 = vpop.f32.mrb[0].mxu0
        %406 = vmatprep.mubr.f32.mxu0 0.0
        %407 = vmatmul.mubr.f32.gmra.mrb[0].mxu0 %v294
        %v408 = vpop.f32.mrb[0].mxu0
        %v409 = vadd.f32 0.0, %v408
        %v410 = vpop.f32.mrb[0].mxu0
        %411 = vmatprep.mubr.f32.mxu0 0.0
        %412 = vmatmul.mubr.f32.gmra.mrb[0].mxu0 %v295
        %v413 = vpop.f32.mrb[0].mxu0
        %v414 = vadd.f32 0.0, %v413
        %v415 = vpop.f32.mrb[0].mxu0
        %416 = vmatprep.mubr.f32.mxu0 0.0
        %417 = vmatmul.mubr.f32.gmra.mrb[0].mxu0 %v296
        %v418 = vpop.f32.mrb[0].mxu0
        %v419 = vadd.f32 0.0, %v418
        %v420 = vpop.f32.mrb[0].mxu0
        %421 = vmatprep.mubr.f32.mxu0 0.0
        %422 = vmatmul.mubr.f32.gmra.mrb[0].mxu0 %v297
        %v423 = vpop.f32.mrb[0].mxu0
        %v424 = vadd.f32 0.0, %v423
        %v425 = vpop.f32.mrb[0].mxu0
        %426 = vmatprep.mubr.f32.mxu0 0.0
        %427 = vmatmul.mubr.f32.gmra.mrb[0].mxu0 %v298
        %v428 = vpop.f32.mrb[0].mxu0
        %v429 = vadd.f32 0.0, %v428
        %v430 = vpop.f32.mrb[0].mxu0
        %431 = vmatprep.mubr.f32.mxu0 0.0
        %432 = vmatmul.mubr.f32.gmra.mrb[0].mxu0 %v299
        %v433 = vpop.f32.mrb[0].mxu0
        %v434 = vadd.f32 0.0, %v433
        %v435 = vpop.f32.mrb[0].mxu0
        %436 = vmatprep.mubr.f32.mxu0 0.0
        %437 = vmatmul.mubr.f32.gmra.mrb[0].mxu0 %v300
        %v438 = vpop.f32.mrb[0].mxu0
        %v439 = vadd.f32 0.0, %v438
        %v440 = vpop.f32.mrb[0].mxu0
        %441 = vmatprep.mubr.f32.mxu0 0.0
        %442 = vmatmul.mubr.f32.gmra.mrb[0].mxu0 %v301
        %v443 = vpop.f32.mrb[0].mxu0
        %v444 = vadd.f32 0.0, %v443
        %v445 = vpop.f32.mrb[0].mxu0
        %446 = vmatprep.mubr.f32.mxu0 0.0
        %447 = vmatmul.mubr.f32.gmra.mrb[0].mxu0 %v302
        %v448 = vpop.f32.mrb[0].mxu0
        %v449 = vadd.f32 0.0, %v448
        %v450 = vpop.f32.mrb[0].mxu0
        %451 = vmatprep.mubr.f32.mxu0 0.0
        %452 = vmatmul.mubr.f32.gmra.mrb[0].mxu0 %v303
        %v453 = vpop.f32.mrb[0].mxu0
        %v454 = vadd.f32 0.0, %v453
        %v455 = vpop.f32.mrb[0].mxu0
        %456 = vmatprep.mubr.f32.mxu0 0.0
        %457 = vmatmul.mubr.f32.gmra.mrb[0].mxu0 %v304
        %v458 = vpop.f32.mrb[0].mxu0
        %v459 = vadd.f32 0.0, %v458
        %v460 = vpop.f32.mrb[0].mxu0
        %461 = vmatprep.mubr.f32.mxu0 0.0
        %462 = vmatmul.mubr.f32.gmra.mrb[0].mxu0 %v305
        %v463 = vpop.f32.mrb[0].mxu0
        %v464 = vadd.f32 0.0, %v463
        %v465 = vpop.f32.mrb[0].mxu0
        %466 = vdwg.mxu0
        %v467 = vld [vmem:[#allocation7] sm:$0xff]
        %v468 = vld [vmem:[#allocation7 + $0x8] sm:$0xff]
        %v469 = vld [vmem:[#allocation7 + $0x10] sm:$0xff]
        %v470 = vld [vmem:[#allocation7 + $0x18] sm:$0xff]
        %v471 = vld [vmem:[#allocation7 + $0x20] sm:$0xff]
        %v472 = vld [vmem:[#allocation7 + $0x28] sm:$0xff]
        %v473 = vld [vmem:[#allocation7 + $0x30] sm:$0xff]
        %v474 = vld [vmem:[#allocation7 + $0x38] sm:$0xff]
        %v475 = vld [vmem:[#allocation7 + $0x40] sm:$0xff]
        %v476 = vld [vmem:[#allocation7 + $0x48] sm:$0xff]
        %v477 = vld [vmem:[#allocation7 + $0x50] sm:$0xff]
        %v478 = vld [vmem:[#allocation7 + $0x58] sm:$0xff]
        %v479 = vld [vmem:[#allocation7 + $0x60] sm:$0xff]
        %v480 = vld [vmem:[#allocation7 + $0x68] sm:$0xff]
        %v481 = vld [vmem:[#allocation7 + $0x70] sm:$0xff]
        %v482 = vld [vmem:[#allocation7 + $0x78] sm:$0xff]
        %v483 = vld [vmem:[%s3] sm:$0x1]
        %v485 = vlaneseq
        %v486 = vshrl.u32 %v485, 7
        %v487 = vsub.s32 0, %v486
        %v488 = vrot.slane %v483, %v487
        %490 = vmatprep.subr.mxu0 0.0
        %491 = vmatpush1.msra.mxu0 %v467
        %492 = vmatprep.subr.mxu0 0.0
        %493 = vmatpush1.msra.mxu0 %v468
        %494 = vmatprep.subr.mxu0 0.0
        %495 = vmatpush1.msra.mxu0 %v469
        %496 = vmatprep.subr.mxu0 0.0
        %497 = vmatpush1.msra.mxu0 %v470
        %498 = vmatprep.subr.mxu0 0.0
        %499 = vmatpush1.msra.mxu0 %v471
        %500 = vmatprep.subr.mxu0 0.0
        %501 = vmatpush1.msra.mxu0 %v472
        %502 = vmatprep.subr.mxu0 0.0
        %503 = vmatpush1.msra.mxu0 %v473
        %504 = vmatprep.subr.mxu0 0.0
        %505 = vmatpush1.msra.mxu0 %v474
        %506 = vmatprep.subr.mxu0 0.0
        %507 = vmatpush1.msra.mxu0 %v475
        %508 = vmatprep.subr.mxu0 0.0
        %509 = vmatpush1.msra.mxu0 %v476
        %510 = vmatprep.subr.mxu0 0.0
        %511 = vmatpush1.msra.mxu0 %v477
        %512 = vmatprep.subr.mxu0 0.0
        %513 = vmatpush1.msra.mxu0 %v478
        %514 = vmatprep.subr.mxu0 0.0
        %515 = vmatpush1.msra.mxu0 %v479
        %516 = vmatprep.subr.mxu0 0.0
        %517 = vmatpush1.msra.mxu0 %v480
        %518 = vmatprep.subr.mxu0 0.0
        %519 = vmatpush1.msra.mxu0 %v481
        %520 = vmatprep.subr.mxu0 0.0
        %521 = vmatpush1.msra.mxu0 %v482
        %522 = vmatprep.subr.mxu0 0.0
        %523 = vmatpush1.msra.mxu0 0.0
        %524 = vmatprep.subr.mxu0 0.0
        %525 = vmatpush1.msra.mxu0 0.0
        %526 = vmatprep.subr.mxu0 0.0
        %527 = vmatpush1.msra.mxu0 0.0
        %528 = vmatprep.subr.mxu0 0.0
        %529 = vmatpush1.msra.mxu0 0.0
        %530 = vmatprep.subr.mxu0 0.0
        %531 = vmatpush1.msra.mxu0 0.0
        %532 = vmatprep.subr.mxu0 0.0
        %533 = vmatpush1.msra.mxu0 0.0
        %534 = vmatprep.subr.mxu0 0.0
        %535 = vmatpush1.msra.mxu0 0.0
        %536 = vmatprep.subr.mxu0 0.0
        %537 = vmatpush1.msra.mxu0 0.0
        %538 = vmatprep.subr.mxu0 0.0
        %539 = vmatpush1.msra.mxu0 0.0
        %540 = vmatprep.subr.mxu0 0.0
        %541 = vmatpush1.msra.mxu0 0.0
        %542 = vmatprep.subr.mxu0 0.0
        %543 = vmatpush1.msra.mxu0 0.0
        %544 = vmatprep.subr.mxu0 0.0
        %545 = vmatpush1.msra.mxu0 0.0
        %546 = vmatprep.subr.mxu0 0.0
        %547 = vmatpush1.msra.mxu0 0.0
        %548 = vmatprep.subr.mxu0 0.0
        %549 = vmatpush1.msra.mxu0 0.0
        %550 = vmatprep.subr.mxu0 0.0
        %551 = vmatpush1.msra.mxu0 0.0
        %552 = vmatprep.subr.mxu0 0.0
        %553 = vmatpush1.msra.mxu0 0.0
        %554 = vmatprep.mubr.f32.mxu0 0.0
        %555 = vmatmul.mubr.f32.gmra.mrb[0].mxu0 %v389
        %v556 = vpop.f32.mrb[0].mxu0
        %v557 = vadd.f32 %v488, %v556
        %v558 = vpop.f32.mrb[0].mxu0
        %559 = vmatprep.mubr.f32.mxu0 0.0
        %560 = vmatmul.mubr.f32.gmra.mrb[0].mxu0 %v394
        %v561 = vpop.f32.mrb[0].mxu0
        %v562 = vadd.f32 %v488, %v561
        %v563 = vpop.f32.mrb[0].mxu0
        %564 = vmatprep.mubr.f32.mxu0 0.0
        %565 = vmatmul.mubr.f32.gmra.mrb[0].mxu0 %v399
        %v566 = vpop.f32.mrb[0].mxu0
        %v567 = vadd.f32 %v488, %v566
        %v568 = vpop.f32.mrb[0].mxu0
        %569 = vmatprep.mubr.f32.mxu0 0.0
        %570 = vmatmul.mubr.f32.gmra.mrb[0].mxu0 %v404
        %v571 = vpop.f32.mrb[0].mxu0
        %v572 = vadd.f32 %v488, %v571
        %v573 = vpop.f32.mrb[0].mxu0
        %574 = vmatprep.mubr.f32.mxu0 0.0
        %575 = vmatmul.mubr.f32.gmra.mrb[0].mxu0 %v409
        %v576 = vpop.f32.mrb[0].mxu0
        %v577 = vadd.f32 %v488, %v576
        %v578 = vpop.f32.mrb[0].mxu0
        %579 = vmatprep.mubr.f32.mxu0 0.0
        %580 = vmatmul.mubr.f32.gmra.mrb[0].mxu0 %v414
        %v581 = vpop.f32.mrb[0].mxu0
        %v582 = vadd.f32 %v488, %v581
        %v583 = vpop.f32.mrb[0].mxu0
        %584 = vmatprep.mubr.f32.mxu0 0.0
        %585 = vmatmul.mubr.f32.gmra.mrb[0].mxu0 %v419
        %v586 = vpop.f32.mrb[0].mxu0
        %v587 = vadd.f32 %v488, %v586
        %v588 = vpop.f32.mrb[0].mxu0
        %589 = vmatprep.mubr.f32.mxu0 0.0
        %590 = vmatmul.mubr.f32.gmra.mrb[0].mxu0 %v424
        %v591 = vpop.f32.mrb[0].mxu0
        %v592 = vadd.f32 %v488, %v591
        %v593 = vpop.f32.mrb[0].mxu0
        %594 = vmatprep.mubr.f32.mxu0 0.0
        %595 = vmatmul.mubr.f32.gmra.mrb[0].mxu0 %v429
        %v596 = vpop.f32.mrb[0].mxu0
        %v597 = vadd.f32 %v488, %v596
        %v598 = vpop.f32.mrb[0].mxu0
        %599 = vmatprep.mubr.f32.mxu0 0.0
        %600 = vmatmul.mubr.f32.gmra.mrb[0].mxu0 %v434
        %v601 = vpop.f32.mrb[0].mxu0
        %v602 = vadd.f32 %v488, %v601
        %v603 = vpop.f32.mrb[0].mxu0
        %604 = vmatprep.mubr.f32.mxu0 0.0
        %605 = vmatmul.mubr.f32.gmra.mrb[0].mxu0 %v439
        %v606 = vpop.f32.mrb[0].mxu0
        %v607 = vadd.f32 %v488, %v606
        %v608 = vpop.f32.mrb[0].mxu0
        %609 = vmatprep.mubr.f32.mxu0 0.0
        %610 = vmatmul.mubr.f32.gmra.mrb[0].mxu0 %v444
        %v611 = vpop.f32.mrb[0].mxu0
        %v612 = vadd.f32 %v488, %v611
        %v613 = vpop.f32.mrb[0].mxu0
        %614 = vmatprep.mubr.f32.mxu0 0.0
        %615 = vmatmul.mubr.f32.gmra.mrb[0].mxu0 %v449
        %v616 = vpop.f32.mrb[0].mxu0
        %v617 = vadd.f32 %v488, %v616
        %v618 = vpop.f32.mrb[0].mxu0
        %619 = vmatprep.mubr.f32.mxu0 0.0
        %620 = vmatmul.mubr.f32.gmra.mrb[0].mxu0 %v454
        %v621 = vpop.f32.mrb[0].mxu0
        %v622 = vadd.f32 %v488, %v621
        %v623 = vpop.f32.mrb[0].mxu0
        %624 = vmatprep.mubr.f32.mxu0 0.0
        %625 = vmatmul.mubr.f32.gmra.mrb[0].mxu0 %v459
        %v626 = vpop.f32.mrb[0].mxu0
        %v627 = vadd.f32 %v488, %v626
        %v628 = vpop.f32.mrb[0].mxu0
        %629 = vmatprep.mubr.f32.mxu0 0.0
        %630 = vmatmul.mubr.f32.gmra.mrb[0].mxu0 %v464
        %v631 = vpop.f32.mrb[0].mxu0
        %v632 = vadd.f32 %v488, %v631
        %v633 = vpop.f32.mrb[0].mxu0
        %634 = vdwg.mxu0
        %635 = vst [vmem:[%s287] sm:$0xff] %v557
        %636 = vst [vmem:[%s287 + $0x8] sm:$0xff] %v562
        %637 = vst [vmem:[%s287 + $0x10] sm:$0xff] %v567
        %638 = vst [vmem:[%s287 + $0x18] sm:$0xff] %v572
        %639 = vst [vmem:[%s287 + $0x20] sm:$0xff] %v577
        %640 = vst [vmem:[%s287 + $0x28] sm:$0xff] %v582
        %641 = vst [vmem:[%s287 + $0x30] sm:$0xff] %v587
        %642 = vst [vmem:[%s287 + $0x38] sm:$0xff] %v592
        %643 = vst [vmem:[%s287 + $0x40] sm:$0xff] %v597
        %644 = vst [vmem:[%s287 + $0x48] sm:$0xff] %v602
        %645 = vst [vmem:[%s287 + $0x50] sm:$0xff] %v607
        %646 = vst [vmem:[%s287 + $0x58] sm:$0xff] %v612
        %647 = vst [vmem:[%s287 + $0x60] sm:$0xff] %v617
        %648 = vst [vmem:[%s287 + $0x68] sm:$0xff] %v622
        %649 = vst [vmem:[%s287 + $0x70] sm:$0xff] %v627
        %650 = vst [vmem:[%s287 + $0x78] sm:$0xff] %v632
        %s651 = sand.u32 %s142, 1
        %s652 = scalar_lea.sflag [#allocation4], %s651
        %s653 = sand.u32 %s142, 1
        %s654 = smul.addr %s653, 128
        %s655 = scalar_lea.vmem [#allocation8], %s654
        // Predicated region
        $region49: #{tpu_custom_call.1} parent=35 // pred_check
          %p656 = pneg %p152
        $region50: #{tpu_custom_call.1} parent=35 // pred_check_branch
          %658 = sbr.rel (%p656) target = $region52
        $region51: #{tpu_custom_call.1} parent=35 // pred_region
          %s659 = smul.u32 16, %s29
          %s661 = ssub.s32 2048, 2048
          %662 = vsyncadd %s652, %s661
          %s663 = smul.addr %s28, 16
          %s664 = sadd.s32 %s659, %s663
          %s665 = smul.addr %s664, 128
          %s666 = scalar_lea.hbm %s4, %s665
          %s667 = sshll.u32 %s655, 4
          %s668 = int_to_ptr.vmem [resolvable:$true] %s667
          %673 = dma.vmem_to_hbm [thread:$0]  %s668, 2048, %s666, %s652, 128, 128, 8
        $region52: #{tpu_custom_call.1} parent=35 // pred_fallthru
          _
      $region36: #{tpu_custom_call.1} parent=5 // pred_fallthru
        _
      %p674 = scmp.le.s32.totalorder 2, %s19
      // Predicated region
      $region53: #{tpu_custom_call.1} parent=5 // pred_check
        %p675 = pneg %p674
      $region54: #{tpu_custom_call.1} parent=5 // pred_check_branch
        %677 = sbr.rel (%p675) target = $region56
      $region55: #{tpu_custom_call.1} parent=5 // pred_region
        %s678 = ssub.s32 %s19, 2
        // Predicated region
        $region57: #{tpu_custom_call.1} parent=55 // pred_check
          %p679 = pneg %p158
        $region58: #{tpu_custom_call.1} parent=55 // pred_check_branch
          %681 = sbr.rel (%p679) target = $region60
        $region59: #{tpu_custom_call.1} parent=55 // pred_region
          %s682 = sand.u32 %s143, 1
          %s683 = scalar_lea.sflag [#allocation4], %s682
          %s684 = sand.u32 %s143, 1
          %s685 = smul.addr %s684, 128
          %s686 = scalar_lea.vmem [#allocation8], %s685
          %687 = dma.done %s683, 2048
        $region60: #{tpu_custom_call.1} parent=55 // pred_fallthru
          _
      $region56: #{tpu_custom_call.1} parent=5 // pred_fallthru
        _
    $region6: #{tpu_custom_call.1} parent=1 // loop_footer
      %s23 = sadd.s32 1, %s19
    $region7: #{tpu_custom_call.1} parent=1 // loop_footer_branch
      %18 = sbr.rel target = $region3
    $region8: #{tpu_custom_call.1} parent=1 // loop_exit
      _
    %688 = vsyncpa [#allocation3], 1
    %s689 = scalar_lea.sflag [#allocation3], 1
    %690 = vsyncpa %s689, 1
    %691 = vsyncpa [#allocation6], 1
    %s692 = scalar_lea.sflag [#allocation6], 1
    %693 = vsyncpa %s692, 1
    %694 = vsyncpa [#allocation4], 1
    %s695 = scalar_lea.sflag [#allocation4], 1
    %696 = vsyncpa %s695, 1

</llo_original>
